<compile_context>
chip_gen: v7x
topology: tpu7x:2x2x1
jax: 0.10.0
libtpu: 0.0.40
codegen_flags: <defaults>
</compile_context>

<pallas_src>
import jax
import jax.numpy as jnp
import numpy as np
from jax.experimental import pallas as pl
from jax.experimental.pallas import tpu as pltpu

_BATCH_TILE = 16  # resident/tile batch size; keeps every intermediate ~1 MiB


def pump_disc_kernel(xq_ref, pm_ref, s_ref, out_ref):
    xq = xq_ref[...]                      # (bb, 128, 16) f32
    Pm = pm_ref[...]                      # (152, 8)      f32
    bb = xq.shape[0]

    Wc = Pm[0:16, 0:6]                    # combined conv1 weight (even|odd_a|odd_b)
    b1r = Pm[16:17, 0:2]                  # (1, 2) conv1 bias
    bLr = Pm[16:17, 4:6]                  # (1, 2) linear bias
    wlt = Pm[24:150, 0:2]                 # (126, 2) = WL.T

    # --- Conv1d(4->2, k=4, s=2): one flattened 2-D matmul, single RHS push.
    #     G[b,g,0:2] = even-phase conv at output 2g (window 4g..4g+3)
    #     G[b,g,2:4] = odd-phase partial from row g   (window pos 4g+2,4g+3)
    #     G[b,g,4:6] = odd-phase partial from row g   (used by output 2(g-1)+1)
    G = jnp.dot(xq.reshape(bb * 128, 16), Wc,
                preferred_element_type=jnp.float32).reshape(bb, 128, 6)
    he = G[:, 0:127, 0:2]
    ho = G[:, 0:127, 2:4] + G[:, 1:128, 4:6]          # sublane-shifted add
    h1e = jnp.maximum(he + b1r, 0.0)                  # (bb, 127, 2)
    h1o = jnp.maximum(ho + b1r, 0.0)                  # (bb, 127, 2)

    # --- Conv1d(2->1, k=4, s=2): 8 scalar*vector VPU FMAs (no MXU round trip)
    #     conv2[t] = fa[t] + fb[t+1] + b2 over interleaved (even,odd) h1 seq.
    fa = (s_ref[0] * h1e[:, :, 0:1] + s_ref[1] * h1e[:, :, 1:2]
          + s_ref[2] * h1o[:, :, 0:1] + s_ref[3] * h1o[:, :, 1:2])
    fb = (s_ref[4] * h1e[:, :, 0:1] + s_ref[5] * h1e[:, :, 1:2]
          + s_ref[6] * h1o[:, :, 0:1] + s_ref[7] * h1o[:, :, 1:2])
    # (If profiling ever shows this shifted slice hot, swap for pltpu.roll.)
    h2 = jnp.maximum(fa[:, 0:126, :] + fb[:, 1:127, :] + s_ref[8], 0.0)

    # --- flatten + Linear(126 -> 2): f32 multiply + sublane reduce.
    out_ref[...] = jnp.sum(h2 * wlt, axis=1) + bLr    # (bb, 2)


def _pump_discriminator(x, W1, b1, W2, b2, WL, bL):
    B, L, C = x.shape
    assert (L, C) == (510, 4), "Linear(126) implies L=510, C=4"
    f32 = jnp.float32
    x = x.astype(f32)

    # ---- layout plumbing (cheap): group 4 input positions per row -----------
    # xq[b, g, 4*p + c] = x[b, 4*g + p, c]; padded positions 510/511 never
    # reach the output (they only feed discarded columns of G).
    xq = jnp.pad(x, ((0, 0), (0, 2), (0, 0))).reshape(B, 128, 16)

    # ---- parameter packing ---------------------------------------------------
    w1m = jnp.transpose(W1.astype(f32), (2, 1, 0)).reshape(16, 2)  # [4k+c, o]
    Wc = jnp.zeros((16, 6), f32)
    Wc = Wc.at[:, 0:2].set(w1m)            # even window  (pos 4j .. 4j+3)
    Wc = Wc.at[8:16, 2:4].set(w1m[0:8])    # odd window, part in row j   (4j+2, 4j+3)
    Wc = Wc.at[0:8, 4:6].set(w1m[8:16])    # odd window, part in row j+1 (4j+4, 4j+5)

    Pm = jnp.zeros((152, 8), f32)          # every group 8-row (sublane) aligned
    Pm = Pm.at[0:16, 0:6].set(Wc)
    Pm = Pm.at[16, 0:2].set(b1.astype(f32))
    Pm = Pm.at[16, 4:6].set(bL.astype(f32))
    Pm = Pm.at[24:150, 0:2].set(WL.astype(f32).T)

    # conv2 weights + bias as SMEM scalars: order [W2[0,c,k] for k in 0..3 for c in 0..1]
    s = jnp.zeros((16,), f32)
    s = s.at[0:8].set(jnp.transpose(W2[0].astype(f32)).reshape(8))
    s = s.at[8].set(b2.astype(f32)[0])

    flops = B * (2 * 128 * 16 * 6 + 127 * 16 + 126 * 2 * 2)
    bytes_accessed = 4 * (B * 128 * 16 + 152 * 8 + 16 + B * 2)
    cost = pl.CostEstimate(flops=flops, transcendentals=0,
                           bytes_accessed=bytes_accessed)

    vmem = pltpu.MemorySpace.VMEM
    smem_spec = pl.BlockSpec(memory_space=pltpu.MemorySpace.SMEM)

    if B <= _BATCH_TILE:
        # Tiny batch: no grid, no pipeline machinery, no megacore split —
        # this regime is pure fixed overhead; everything sits in VMEM.
        out = pl.pallas_call(
            pump_disc_kernel,
            out_shape=jax.ShapeDtypeStruct((B, 2), jnp.float32),
            in_specs=[pl.BlockSpec(memory_space=vmem),
                      pl.BlockSpec(memory_space=vmem),
                      smem_spec],
            out_specs=pl.BlockSpec(memory_space=vmem),
            cost_estimate=cost,
        )(xq, Pm, s)
        return out

    # Larger batch: 1-D batch-tiled grid -> double-buffered DMA pipeline and
    # (on multi-TensorCore chips) megacore sharding of the batch axis.
    bt = _BATCH_TILE
    Bp = ((B + bt - 1) // bt) * bt
    if Bp != B:
        xq = jnp.pad(xq, ((0, Bp - B), (0, 0), (0, 0)))
    out = pl.pallas_call(
        pump_disc_kernel,
        out_shape=jax.ShapeDtypeStruct((Bp, 2), jnp.float32),
        grid=(Bp // bt,),
        in_specs=[pl.BlockSpec((bt, 128, 16), lambda i: (i, 0, 0)),
                  pl.BlockSpec((152, 8), lambda i: (0, 0)),
                  smem_spec],
        out_specs=pl.BlockSpec((bt, 2), lambda i: (i, 0)),
        compiler_params=pltpu.CompilerParams(
            dimension_semantics=("parallel",),
            vmem_limit_bytes=32 * 1024 * 1024),
        cost_estimate=cost,
    )(xq, Pm, s)
    return out[:B]


pump_discriminator = jax.jit(_pump_discriminator)


def reference(x, W1, b1, W2, b2, WL, bL):
    # pure-JAX reference mirroring the PyTorch forward exactly (f32 throughout)
    xt = jnp.transpose(x, (0, 2, 1))                    # (B, 4, 510)  NCW
    y1 = jax.lax.conv_general_dilated(
        xt, W1, window_strides=(2,), padding="VALID",
        dimension_numbers=("NCH", "OIH", "NCH"),
        precision=jax.lax.Precision.HIGHEST)
    y1 = jnp.maximum(y1 + b1[None, :, None], 0.0)       # (B, 2, 254)
    y2 = jax.lax.conv_general_dilated(
        y1, W2, window_strides=(2,), padding="VALID",
        dimension_numbers=("NCH", "OIH", "NCH"),
        precision=jax.lax.Precision.HIGHEST)
    y2 = jnp.maximum(y2 + b2[None, :, None], 0.0)       # (B, 1, 126)
    flat = y2.reshape(y2.shape[0], -1)                  # (B, 126)
    return jnp.dot(flat, WL.T,
                   precision=jax.lax.Precision.HIGHEST) + bL[None, :]


if __name__ == "__main__":
    key = jax.random.PRNGKey(0)
    kx, k1, k2, k3, k4, k5, k6 = jax.random.split(key, 7)

    B, L, C = 2, 510, 4        # Linear(in_features=126) forces L = 510
    x = jax.random.normal(kx, (B, L, C), jnp.float32)

    # deterministic synthetic parameters (shapes from nn.Module __init__)
    W1 = 0.2 * jax.random.normal(k1, (2, 4, 4), jnp.float32)   # Conv1d(4,2,4)
    b1 = 0.1 * jax.random.normal(k2, (2,), jnp.float32)
    W2 = 0.2 * jax.random.normal(k3, (1, 2, 4), jnp.float32)   # Conv1d(2,1,4)
    b2 = 0.1 * jax.random.normal(k4, (1,), jnp.float32)
    WL = 0.1 * jax.random.normal(k5, (2, 126), jnp.float32)    # Linear(126,2)
    bL = 0.1 * jax.random.normal(k6, (2,), jnp.float32)

    out = jax.block_until_ready(pump_discriminator(x, W1, b1, W2, b2, WL, bL))
    ref = jax.block_until_ready(reference(x, W1, b1, W2, b2, WL, bL))
    # Tolerance covers the conv1 matmul running at default (single-bf16-pass)
    # MXU precision vs the f32 (HIGHEST) reference; conv2 and the Linear stay
    # in f32, so any semantic bug would blow far past this bound.
    np.testing.assert_allclose(np.asarray(out), np.asarray(ref),
                               rtol=5e-3, atol=5e-3)
    print("KERNEL_OK")
</pallas_src>

<mosaic_0001>
module attributes {stable_mosaic.version = 11 : i64} {
  func.func @pump_disc_kernel(%arg0: memref<2x128x16xf32, #tpu.memory_space<vmem>>, %arg1: memref<152x8xf32, #tpu.memory_space<vmem>>, %arg2: memref<16xf32, #tpu.memory_space<smem>>, %arg3: memref<2x2xf32, #tpu.memory_space<vmem>>) attributes {dimension_semantics = [], scalar_prefetch = 0 : i64, scratch_operands = 0 : i64, tpu.core_type = #tpu.core_type<tc>} {
    %c0 = arith.constant 0 : index
    %c0_0 = arith.constant 0 : index
    %c0_1 = arith.constant 0 : index
    %0 = vector.load %arg0[%c0, %c0_0, %c0_1] : memref<2x128x16xf32, #tpu.memory_space<vmem>>, vector<2x128x16xf32>
    %c0_2 = arith.constant 0 : index
    %c0_3 = arith.constant 0 : index
    %1 = vector.load %arg1[%c0_2, %c0_3] : memref<152x8xf32, #tpu.memory_space<vmem>>, vector<152x8xf32>
    %2 = vector.extract_strided_slice %1 {offsets = [0, 0], sizes = [16, 6], strides = [1, 1]} : vector<152x8xf32> to vector<16x6xf32>
    %3 = vector.extract_strided_slice %1 {offsets = [16, 0], sizes = [1, 2], strides = [1, 1]} : vector<152x8xf32> to vector<1x2xf32>
    %4 = vector.extract_strided_slice %1 {offsets = [16, 4], sizes = [1, 2], strides = [1, 1]} : vector<152x8xf32> to vector<1x2xf32>
    %5 = vector.extract_strided_slice %1 {offsets = [24, 0], sizes = [126, 2], strides = [1, 1]} : vector<152x8xf32> to vector<126x2xf32>
    %6 = vector.shape_cast %0 : vector<2x128x16xf32> to vector<256x16xf32>
    %cst = arith.constant dense<0.000000e+00> : vector<256x6xf32>
    %7 = tpu.matmul %6, %2, %cst {dimension_numbers = #tpu.dot_dimension_numbers<[1], [0], [0], [1], [0, 0, 1, 1], [], []>} : vector<256x16xf32>, vector<16x6xf32>, vector<256x6xf32> -> vector<256x6xf32>
    %8 = vector.shape_cast %7 : vector<256x6xf32> to vector<2x128x6xf32>
    %9 = vector.extract_strided_slice %8 {offsets = [0, 0, 0], sizes = [2, 127, 2], strides = [1, 1, 1]} : vector<2x128x6xf32> to vector<2x127x2xf32>
    %10 = vector.extract_strided_slice %8 {offsets = [0, 0, 2], sizes = [2, 127, 2], strides = [1, 1, 1]} : vector<2x128x6xf32> to vector<2x127x2xf32>
    %11 = vector.extract_strided_slice %8 {offsets = [0, 1, 4], sizes = [2, 127, 2], strides = [1, 1, 1]} : vector<2x128x6xf32> to vector<2x127x2xf32>
    %12 = arith.addf %10, %11 : vector<2x127x2xf32>
    %13 = vector.shape_cast %3 : vector<1x2xf32> to vector<1x1x2xf32>
    %14 = vector.broadcast %13 : vector<1x1x2xf32> to vector<2x127x2xf32>
    %15 = arith.addf %9, %14 : vector<2x127x2xf32>
    %cst_4 = arith.constant 0.000000e+00 : f32
    %16 = vector.broadcast %cst_4 : f32 to vector<2x127x2xf32>
    %17 = arith.maximumf %15, %16 : vector<2x127x2xf32>
    %18 = vector.shape_cast %3 : vector<1x2xf32> to vector<1x1x2xf32>
    %19 = vector.broadcast %18 : vector<1x1x2xf32> to vector<2x127x2xf32>
    %20 = arith.addf %12, %19 : vector<2x127x2xf32>
    %cst_5 = arith.constant 0.000000e+00 : f32
    %21 = vector.broadcast %cst_5 : f32 to vector<2x127x2xf32>
    %22 = arith.maximumf %20, %21 : vector<2x127x2xf32>
    %c0_6 = arith.constant 0 : index
    %23 = memref.load %arg2[%c0_6] : memref<16xf32, #tpu.memory_space<smem>>
    %24 = vector.extract_strided_slice %17 {offsets = [0, 0, 0], sizes = [2, 127, 1], strides = [1, 1, 1]} : vector<2x127x2xf32> to vector<2x127x1xf32>
    %25 = vector.broadcast %23 : f32 to vector<2x127x1xf32>
    %26 = arith.mulf %25, %24 : vector<2x127x1xf32>
    %c1 = arith.constant 1 : index
    %27 = memref.load %arg2[%c1] : memref<16xf32, #tpu.memory_space<smem>>
    %28 = vector.extract_strided_slice %17 {offsets = [0, 0, 1], sizes = [2, 127, 1], strides = [1, 1, 1]} : vector<2x127x2xf32> to vector<2x127x1xf32>
    %29 = vector.broadcast %27 : f32 to vector<2x127x1xf32>
    %30 = arith.mulf %29, %28 : vector<2x127x1xf32>
    %31 = arith.addf %26, %30 : vector<2x127x1xf32>
    %c2 = arith.constant 2 : index
    %32 = memref.load %arg2[%c2] : memref<16xf32, #tpu.memory_space<smem>>
    %33 = vector.extract_strided_slice %22 {offsets = [0, 0, 0], sizes = [2, 127, 1], strides = [1, 1, 1]} : vector<2x127x2xf32> to vector<2x127x1xf32>
    %34 = vector.broadcast %32 : f32 to vector<2x127x1xf32>
    %35 = arith.mulf %34, %33 : vector<2x127x1xf32>
    %36 = arith.addf %31, %35 : vector<2x127x1xf32>
    %c3 = arith.constant 3 : index
    %37 = memref.load %arg2[%c3] : memref<16xf32, #tpu.memory_space<smem>>
    %38 = vector.extract_strided_slice %22 {offsets = [0, 0, 1], sizes = [2, 127, 1], strides = [1, 1, 1]} : vector<2x127x2xf32> to vector<2x127x1xf32>
    %39 = vector.broadcast %37 : f32 to vector<2x127x1xf32>
    %40 = arith.mulf %39, %38 : vector<2x127x1xf32>
    %41 = arith.addf %36, %40 : vector<2x127x1xf32>
    %c4 = arith.constant 4 : index
    %42 = memref.load %arg2[%c4] : memref<16xf32, #tpu.memory_space<smem>>
    %43 = vector.extract_strided_slice %17 {offsets = [0, 0, 0], sizes = [2, 127, 1], strides = [1, 1, 1]} : vector<2x127x2xf32> to vector<2x127x1xf32>
    %44 = vector.broadcast %42 : f32 to vector<2x127x1xf32>
    %45 = arith.mulf %44, %43 : vector<2x127x1xf32>
    %c5 = arith.constant 5 : index
    %46 = memref.load %arg2[%c5] : memref<16xf32, #tpu.memory_space<smem>>
    %47 = vector.extract_strided_slice %17 {offsets = [0, 0, 1], sizes = [2, 127, 1], strides = [1, 1, 1]} : vector<2x127x2xf32> to vector<2x127x1xf32>
    %48 = vector.broadcast %46 : f32 to vector<2x127x1xf32>
    %49 = arith.mulf %48, %47 : vector<2x127x1xf32>
    %50 = arith.addf %45, %49 : vector<2x127x1xf32>
    %c6 = arith.constant 6 : index
    %51 = memref.load %arg2[%c6] : memref<16xf32, #tpu.memory_space<smem>>
    %52 = vector.extract_strided_slice %22 {offsets = [0, 0, 0], sizes = [2, 127, 1], strides = [1, 1, 1]} : vector<2x127x2xf32> to vector<2x127x1xf32>
    %53 = vector.broadcast %51 : f32 to vector<2x127x1xf32>
    %54 = arith.mulf %53, %52 : vector<2x127x1xf32>
    %55 = arith.addf %50, %54 : vector<2x127x1xf32>
    %c7 = arith.constant 7 : index
    %56 = memref.load %arg2[%c7] : memref<16xf32, #tpu.memory_space<smem>>
    %57 = vector.extract_strided_slice %22 {offsets = [0, 0, 1], sizes = [2, 127, 1], strides = [1, 1, 1]} : vector<2x127x2xf32> to vector<2x127x1xf32>
    %58 = vector.broadcast %56 : f32 to vector<2x127x1xf32>
    %59 = arith.mulf %58, %57 : vector<2x127x1xf32>
    %60 = arith.addf %55, %59 : vector<2x127x1xf32>
    %61 = vector.extract_strided_slice %41 {offsets = [0, 0, 0], sizes = [2, 126, 1], strides = [1, 1, 1]} : vector<2x127x1xf32> to vector<2x126x1xf32>
    %62 = vector.extract_strided_slice %60 {offsets = [0, 1, 0], sizes = [2, 126, 1], strides = [1, 1, 1]} : vector<2x127x1xf32> to vector<2x126x1xf32>
    %63 = arith.addf %61, %62 : vector<2x126x1xf32>
    %c8 = arith.constant 8 : index
    %64 = memref.load %arg2[%c8] : memref<16xf32, #tpu.memory_space<smem>>
    %65 = vector.broadcast %64 : f32 to vector<2x126x1xf32>
    %66 = arith.addf %63, %65 : vector<2x126x1xf32>
    %cst_7 = arith.constant 0.000000e+00 : f32
    %67 = vector.broadcast %cst_7 : f32 to vector<2x126x1xf32>
    %68 = arith.maximumf %66, %67 : vector<2x126x1xf32>
    %69 = vector.shape_cast %5 : vector<126x2xf32> to vector<1x126x2xf32>
    %70 = vector.broadcast %68 : vector<2x126x1xf32> to vector<2x126x2xf32>
    %71 = vector.broadcast %69 : vector<1x126x2xf32> to vector<2x126x2xf32>
    %72 = arith.mulf %70, %71 : vector<2x126x2xf32>
    %cst_8 = arith.constant dense<0.000000e+00> : vector<2x2xf32>
    %73 = vector.multi_reduction <add>, %72, %cst_8 [1] : vector<2x126x2xf32> to vector<2x2xf32>
    %74 = vector.broadcast %4 : vector<1x2xf32> to vector<2x2xf32>
    %75 = arith.addf %73, %74 : vector<2x2xf32>
    %c0_9 = arith.constant 0 : index
    %c0_10 = arith.constant 0 : index
    %76 = vector.load %arg3[%c0_9, %c0_10] : memref<2x2xf32, #tpu.memory_space<vmem>>, vector<2x2xf32>
    tpu.vector_store %arg3[%c0_9, %c0_10], %75 {strides = array<i32>} : memref<2x2xf32, #tpu.memory_space<vmem>>, vector<2x2xf32>,
    return
  }
}

</mosaic_0001>

<llo_original>
// kernel: _pump_discriminator.1
$region0: #{_pump_discriminator.1}
  #allocation0 [shape = 'u32[]', space=smem, size = 0x4, offset = 0x4, fixed_abs, tag = 'smem constant byte address 0x4 - core index']
  #allocation1 [shape = 'u32[144,128]{1,0:T(1,128)}', space=vmem, size = 0x12000, scoped, tag = 'internal scratch']
  %s0 = inlined_call_operand.vmem [shape: f32[2,128,16], index: 0, kind: input, shape index: {}]
  %s1 = inlined_call_operand.vmem [shape: f32[152,8], index: 1, kind: input, shape index: {}]
  %s2 = inlined_call_operand.vmem [shape: f32[16], index: 2, kind: input, shape index: {}]
  %s3 = inlined_call_operand.hbm [shape: f32[2,2], index: 3, kind: output, shape index: {}]
  %s4 = sld [smem:[#allocation0]]
  $region26: #{_pump_discriminator.1} parent=0
    _
  %s6 = ssub.s32 1, %s4
  %s7 = scalar_select 0, %s6, %s4
  $region1: #{_pump_discriminator.1} parent=0
    #allocation2 [shape = 'u8[512]{0}', space=smem, size = 0x200, scoped, tag = 'input window, operand 2, single buffered']
    #allocation3 [shape = 's32[1]{0}', space=sflag, size = 0x4, scoped, tag = 'scoped memory for _pump_discriminator.1']
    #allocation4 [shape = 's32[1]{0}', space=sflag, size = 0x4, scoped, tag = 'scoped memory for _pump_discriminator.1']
    #allocation5 [shape = 'u8[1024]{0}', space=vmem, size = 0x400, scoped, tag = 'output window, operand 0, single buffered']
    %8 = vsyncpa [#allocation4], 0
    %9 = vsyncpa [#allocation3], 0
    // Predicated region
    $region2: #{_pump_discriminator.1} parent=1 // pred_check
      _
    $region3: #{_pump_discriminator.1} parent=1 // pred_check_branch
      %11 = sbr.rel (0) target = $region5
    $region4: #{_pump_discriminator.1} parent=1 // pred_region
      _
    $region5: #{_pump_discriminator.1} parent=1 // pred_fallthru
      _
    // Predicated region
    $region6: #{_pump_discriminator.1} parent=1 // pred_check
      _
    $region7: #{_pump_discriminator.1} parent=1 // pred_check_branch
      %13 = sbr.rel (0) target = $region9
    $region8: #{_pump_discriminator.1} parent=1 // pred_region
      _
    $region9: #{_pump_discriminator.1} parent=1 // pred_fallthru
      _
    // Predicated region
    $region10: #{_pump_discriminator.1} parent=1 // pred_check
      _
    $region11: #{_pump_discriminator.1} parent=1 // pred_check_branch
      %15 = sbr.rel (0) target = $region13
    $region12: #{_pump_discriminator.1} parent=1 // pred_region
      %s17 = ssub.s32 16, 16
      %18 = vsyncadd [#allocation4], %s17
      %s20 = sshll.u32 %s2, 4
      %s21 = int_to_ptr.vmem [resolvable:$true] %s20
      %23 = dma.vmem_to_smem %s21, 16, [#allocation2], [#allocation4]
    $region13: #{_pump_discriminator.1} parent=1 // pred_fallthru
      _
    // Predicated region
    $region14: #{_pump_discriminator.1} parent=1 // pred_check
      _
    $region15: #{_pump_discriminator.1} parent=1 // pred_check_branch
      %25 = sbr.rel (0) target = $region17
    $region16: #{_pump_discriminator.1} parent=1 // pred_region
      %26 = dma.done [#allocation4], 16
    $region17: #{_pump_discriminator.1} parent=1 // pred_fallthru
      _
    %27 = sfence
    %v28 = vld [vmem:[%s0] sm:$0xff]
    %v29 = vld [vmem:[%s0 + $0x8] sm:$0xff]
    %v30 = vld [vmem:[%s0 + $0x10] sm:$0xff]
    %v31 = vld [vmem:[%s0 + $0x18] sm:$0xff]
    %v32 = vld [vmem:[%s0 + $0x20] sm:$0xff]
    %v33 = vld [vmem:[%s0 + $0x28] sm:$0xff]
    %v34 = vld [vmem:[%s0 + $0x30] sm:$0xff]
    %v35 = vld [vmem:[%s0 + $0x38] sm:$0xff]
    %v36 = vld [vmem:[%s0 + $0x40] sm:$0xff]
    %v37 = vld [vmem:[%s0 + $0x48] sm:$0xff]
    %v38 = vld [vmem:[%s0 + $0x50] sm:$0xff]
    %v39 = vld [vmem:[%s0 + $0x58] sm:$0xff]
    %v40 = vld [vmem:[%s0 + $0x60] sm:$0xff]
    %v41 = vld [vmem:[%s0 + $0x68] sm:$0xff]
    %v42 = vld [vmem:[%s0 + $0x70] sm:$0xff]
    %v43 = vld [vmem:[%s0 + $0x78] sm:$0xff]
    %v44 = vld [vmem:[%s0 + $0x80] sm:$0xff]
    %v45 = vld [vmem:[%s0 + $0x88] sm:$0xff]
    %v46 = vld [vmem:[%s0 + $0x90] sm:$0xff]
    %v47 = vld [vmem:[%s0 + $0x98] sm:$0xff]
    %v48 = vld [vmem:[%s0 + $0xa0] sm:$0xff]
    %v49 = vld [vmem:[%s0 + $0xa8] sm:$0xff]
    %v50 = vld [vmem:[%s0 + $0xb0] sm:$0xff]
    %v51 = vld [vmem:[%s0 + $0xb8] sm:$0xff]
    %v52 = vld [vmem:[%s0 + $0xc0] sm:$0xff]
    %v53 = vld [vmem:[%s0 + $0xc8] sm:$0xff]
    %v54 = vld [vmem:[%s0 + $0xd0] sm:$0xff]
    %v55 = vld [vmem:[%s0 + $0xd8] sm:$0xff]
    %v56 = vld [vmem:[%s0 + $0xe0] sm:$0xff]
    %v57 = vld [vmem:[%s0 + $0xe8] sm:$0xff]
    %v58 = vld [vmem:[%s0 + $0xf0] sm:$0xff]
    %v59 = vld [vmem:[%s0 + $0xf8] sm:$0xff]
    %v60 = vld [vmem:[%s1] sm:$0xff]
    %v61 = vld [vmem:[%s1 + $0x8] sm:$0xff]
    %v62 = vld [vmem:[%s1 + $0x10] sm:$0xff]
    %v63 = vld [vmem:[%s1 + $0x18] sm:$0xff]
    %v64 = vld [vmem:[%s1 + $0x20] sm:$0xff]
    %v65 = vld [vmem:[%s1 + $0x28] sm:$0xff]
    %v66 = vld [vmem:[%s1 + $0x30] sm:$0xff]
    %v67 = vld [vmem:[%s1 + $0x38] sm:$0xff]
    %v68 = vld [vmem:[%s1 + $0x40] sm:$0xff]
    %v69 = vld [vmem:[%s1 + $0x48] sm:$0xff]
    %v70 = vld [vmem:[%s1 + $0x50] sm:$0xff]
    %v71 = vld [vmem:[%s1 + $0x58] sm:$0xff]
    %v72 = vld [vmem:[%s1 + $0x60] sm:$0xff]
    %v73 = vld [vmem:[%s1 + $0x68] sm:$0xff]
    %v74 = vld [vmem:[%s1 + $0x70] sm:$0xff]
    %v75 = vld [vmem:[%s1 + $0x78] sm:$0xff]
    %v76 = vld [vmem:[%s1 + $0x80] sm:$0xff]
    %v77 = vld [vmem:[%s1 + $0x88] sm:$0xff]
    %v78 = vld [vmem:[%s1 + $0x90] sm:$0xff]
    %vm79 = vcmask 130048
    %v81 = vsel %vm79, %v28, 0
    %v84 = vsel %vm79, %v29, 0
    %v87 = vsel %vm79, %v30, 0
    %v90 = vsel %vm79, %v31, 0
    %v93 = vsel %vm79, %v32, 0
    %v96 = vsel %vm79, %v33, 0
    %v99 = vsel %vm79, %v34, 0
    %v102 = vsel %vm79, %v35, 0
    %v105 = vsel %vm79, %v36, 0
    %v108 = vsel %vm79, %v37, 0
    %v111 = vsel %vm79, %v38, 0
    %v114 = vsel %vm79, %v39, 0
    %v117 = vsel %vm79, %v40, 0
    %v120 = vsel %vm79, %v41, 0
    %v123 = vsel %vm79, %v42, 0
    %v126 = vsel %vm79, %v43, 0
    %v129 = vsel %vm79, %v44, 0
    %v132 = vsel %vm79, %v45, 0
    %v135 = vsel %vm79, %v46, 0
    %v138 = vsel %vm79, %v47, 0
    %v141 = vsel %vm79, %v48, 0
    %v144 = vsel %vm79, %v49, 0
    %v147 = vsel %vm79, %v50, 0
    %v150 = vsel %vm79, %v51, 0
    %v153 = vsel %vm79, %v52, 0
    %v156 = vsel %vm79, %v53, 0
    %v159 = vsel %vm79, %v54, 0
    %v162 = vsel %vm79, %v55, 0
    %v165 = vsel %vm79, %v56, 0
    %v168 = vsel %vm79, %v57, 0
    %v171 = vsel %vm79, %v58, 0
    %v174 = vsel %vm79, %v59, 0
    %176 = vmatprep.subr.mxu0 0.0
    %177 = vmatpush1.msra.mxu0 %v60
    %178 = vmatprep.subr.mxu0 0.0
    %179 = vmatpush1.msra.mxu0 %v61
    %180 = vmatprep.subr.mxu0 0.0
    %181 = vmatpush1.msra.mxu0 0.0
    %182 = vmatprep.subr.mxu0 0.0
    %183 = vmatpush1.msra.mxu0 0.0
    %184 = vmatprep.subr.mxu0 0.0
    %185 = vmatpush1.msra.mxu0 0.0
    %186 = vmatprep.subr.mxu0 0.0
    %187 = vmatpush1.msra.mxu0 0.0
    %188 = vmatprep.subr.mxu0 0.0
    %189 = vmatpush1.msra.mxu0 0.0
    %190 = vmatprep.subr.mxu0 0.0
    %191 = vmatpush1.msra.mxu0 0.0
    %192 = vmatprep.subr.mxu0 0.0
    %193 = vmatpush1.msra.mxu0 0.0
    %194 = vmatprep.subr.mxu0 0.0
    %195 = vmatpush1.msra.mxu0 0.0
    %196 = vmatprep.subr.mxu0 0.0
    %197 = vmatpush1.msra.mxu0 0.0
    %198 = vmatprep.subr.mxu0 0.0
    %199 = vmatpush1.msra.mxu0 0.0
    %200 = vmatprep.subr.mxu0 0.0
    %201 = vmatpush1.msra.mxu0 0.0
    %202 = vmatprep.subr.mxu0 0.0
    %203 = vmatpush1.msra.mxu0 0.0
    %204 = vmatprep.subr.mxu0 0.0
    %205 = vmatpush1.msra.mxu0 0.0
    %206 = vmatprep.subr.mxu0 0.0
    %207 = vmatpush1.msra.mxu0 0.0
    %208 = vmatprep.subr.mxu0 0.0
    %209 = vmatpush1.msra.mxu0 0.0
    %210 = vmatprep.subr.mxu0 0.0
    %211 = vmatpush1.msra.mxu0 0.0
    %212 = vmatprep.subr.mxu0 0.0
    %213 = vmatpush1.msra.mxu0 0.0
    %214 = vmatprep.subr.mxu0 0.0
    %215 = vmatpush1.msra.mxu0 0.0
    %216 = vmatprep.subr.mxu0 0.0
    %217 = vmatpush1.msra.mxu0 0.0
    %218 = vmatprep.subr.mxu0 0.0
    %219 = vmatpush1.msra.mxu0 0.0
    %220 = vmatprep.subr.mxu0 0.0
    %221 = vmatpush1.msra.mxu0 0.0
    %222 = vmatprep.subr.mxu0 0.0
    %223 = vmatpush1.msra.mxu0 0.0
    %224 = vmatprep.subr.mxu0 0.0
    %225 = vmatpush1.msra.mxu0 0.0
    %226 = vmatprep.subr.mxu0 0.0
    %227 = vmatpush1.msra.mxu0 0.0
    %228 = vmatprep.subr.mxu0 0.0
    %229 = vmatpush1.msra.mxu0 0.0
    %230 = vmatprep.subr.mxu0 0.0
    %231 = vmatpush1.msra.mxu0 0.0
    %232 = vmatprep.subr.mxu0 0.0
    %233 = vmatpush1.msra.mxu0 0.0
    %234 = vmatprep.subr.mxu0 0.0
    %235 = vmatpush1.msra.mxu0 0.0
    %236 = vmatprep.subr.mxu0 0.0
    %237 = vmatpush1.msra.mxu0 0.0
    %238 = vmatprep.subr.mxu0 0.0
    %239 = vmatpush1.msra.mxu0 0.0
    %240 = vmatprep.mubr.f32.mxu0 0.0
    %241 = vmatmul.mubr.f32.gmra.mrb[0].mxu0 %v81
    %v242 = vpop.f32.mrb[0].mxu0
    %v243 = vadd.f32 0.0, %v242
    %v244 = vpop.f32.mrb[0].mxu0
    %245 = vmatprep.mubr.f32.mxu0 0.0
    %246 = vmatmul.mubr.f32.gmra.mrb[0].mxu0 %v84
    %v247 = vpop.f32.mrb[0].mxu0
    %v248 = vadd.f32 0.0, %v247
    %v249 = vpop.f32.mrb[0].mxu0
    %250 = vmatprep.mubr.f32.mxu0 0.0
    %251 = vmatmul.mubr.f32.gmra.mrb[0].mxu0 %v87
    %v252 = vpop.f32.mrb[0].mxu0
    %v253 = vadd.f32 0.0, %v252
    %v254 = vpop.f32.mrb[0].mxu0
    %255 = vmatprep.mubr.f32.mxu0 0.0
    %256 = vmatmul.mubr.f32.gmra.mrb[0].mxu0 %v90
    %v257 = vpop.f32.mrb[0].mxu0
    %v258 = vadd.f32 0.0, %v257
    %v259 = vpop.f32.mrb[0].mxu0
    %260 = vmatprep.mubr.f32.mxu0 0.0
    %261 = vmatmul.mubr.f32.gmra.mrb[0].mxu0 %v93
    %v262 = vpop.f32.mrb[0].mxu0
    %v263 = vadd.f32 0.0, %v262
    %v264 = vpop.f32.mrb[0].mxu0
    %265 = vmatprep.mubr.f32.mxu0 0.0
    %266 = vmatmul.mubr.f32.gmra.mrb[0].mxu0 %v96
    %v267 = vpop.f32.mrb[0].mxu0
    %v268 = vadd.f32 0.0, %v267
    %v269 = vpop.f32.mrb[0].mxu0
    %270 = vmatprep.mubr.f32.mxu0 0.0
    %271 = vmatmul.mubr.f32.gmra.mrb[0].mxu0 %v99
    %v272 = vpop.f32.mrb[0].mxu0
    %v273 = vadd.f32 0.0, %v272
    %v274 = vpop.f32.mrb[0].mxu0
    %275 = vmatprep.mubr.f32.mxu0 0.0
    %276 = vmatmul.mubr.f32.gmra.mrb[0].mxu0 %v102
    %v277 = vpop.f32.mrb[0].mxu0
    %v278 = vadd.f32 0.0, %v277
    %v279 = vpop.f32.mrb[0].mxu0
    %280 = vmatprep.mubr.f32.mxu0 0.0
    %281 = vmatmul.mubr.f32.gmra.mrb[0].mxu0 %v105
    %v282 = vpop.f32.mrb[0].mxu0
    %v283 = vadd.f32 0.0, %v282
    %v284 = vpop.f32.mrb[0].mxu0
    %285 = vmatprep.mubr.f32.mxu0 0.0
    %286 = vmatmul.mubr.f32.gmra.mrb[0].mxu0 %v108
    %v287 = vpop.f32.mrb[0].mxu0
    %v288 = vadd.f32 0.0, %v287
    %v289 = vpop.f32.mrb[0].mxu0
    %290 = vmatprep.mubr.f32.mxu0 0.0
    %291 = vmatmul.mubr.f32.gmra.mrb[0].mxu0 %v111
    %v292 = vpop.f32.mrb[0].mxu0
    %v293 = vadd.f32 0.0, %v292
    %v294 = vpop.f32.mrb[0].mxu0
    %295 = vmatprep.mubr.f32.mxu0 0.0
    %296 = vmatmul.mubr.f32.gmra.mrb[0].mxu0 %v114
    %v297 = vpop.f32.mrb[0].mxu0
    %v298 = vadd.f32 0.0, %v297
    %v299 = vpop.f32.mrb[0].mxu0
    %300 = vmatprep.mubr.f32.mxu0 0.0
    %301 = vmatmul.mubr.f32.gmra.mrb[0].mxu0 %v117
    %v302 = vpop.f32.mrb[0].mxu0
    %v303 = vadd.f32 0.0, %v302
    %v304 = vpop.f32.mrb[0].mxu0
    %305 = vmatprep.mubr.f32.mxu0 0.0
    %306 = vmatmul.mubr.f32.gmra.mrb[0].mxu0 %v120
    %v307 = vpop.f32.mrb[0].mxu0
    %v308 = vadd.f32 0.0, %v307
    %v309 = vpop.f32.mrb[0].mxu0
    %310 = vmatprep.mubr.f32.mxu0 0.0
    %311 = vmatmul.mubr.f32.gmra.mrb[0].mxu0 %v123
    %v312 = vpop.f32.mrb[0].mxu0
    %v313 = vadd.f32 0.0, %v312
    %v314 = vpop.f32.mrb[0].mxu0
    %315 = vmatprep.mubr.f32.mxu0 0.0
    %316 = vmatmul.mubr.f32.gmra.mrb[0].mxu0 %v126
    %v317 = vpop.f32.mrb[0].mxu0
    %v318 = vadd.f32 0.0, %v317
    %v319 = vpop.f32.mrb[0].mxu0
    %320 = vmatprep.mubr.f32.mxu0 0.0
    %321 = vmatmul.mubr.f32.gmra.mrb[0].mxu0 %v129
    %v322 = vpop.f32.mrb[0].mxu0
    %v323 = vadd.f32 0.0, %v322
    %v324 = vpop.f32.mrb[0].mxu0
    %325 = vmatprep.mubr.f32.mxu0 0.0
    %326 = vmatmul.mubr.f32.gmra.mrb[0].mxu0 %v132
    %v327 = vpop.f32.mrb[0].mxu0
    %v328 = vadd.f32 0.0, %v327
    %v329 = vpop.f32.mrb[0].mxu0
    %330 = vmatprep.mubr.f32.mxu0 0.0
    %331 = vmatmul.mubr.f32.gmra.mrb[0].mxu0 %v135
    %v332 = vpop.f32.mrb[0].mxu0
    %v333 = vadd.f32 0.0, %v332
    %v334 = vpop.f32.mrb[0].mxu0
    %335 = vmatprep.mubr.f32.mxu0 0.0
    %336 = vmatmul.mubr.f32.gmra.mrb[0].mxu0 %v138
    %v337 = vpop.f32.mrb[0].mxu0
    %v338 = vadd.f32 0.0, %v337
    %v339 = vpop.f32.mrb[0].mxu0
    %340 = vmatprep.mubr.f32.mxu0 0.0
    %341 = vmatmul.mubr.f32.gmra.mrb[0].mxu0 %v141
    %v342 = vpop.f32.mrb[0].mxu0
    %v343 = vadd.f32 0.0, %v342
    %v344 = vpop.f32.mrb[0].mxu0
    %345 = vmatprep.mubr.f32.mxu0 0.0
    %346 = vmatmul.mubr.f32.gmra.mrb[0].mxu0 %v144
    %v347 = vpop.f32.mrb[0].mxu0
    %v348 = vadd.f32 0.0, %v347
    %v349 = vpop.f32.mrb[0].mxu0
    %350 = vmatprep.mubr.f32.mxu0 0.0
    %351 = vmatmul.mubr.f32.gmra.mrb[0].mxu0 %v147
    %v352 = vpop.f32.mrb[0].mxu0
    %v353 = vadd.f32 0.0, %v352
    %v354 = vpop.f32.mrb[0].mxu0
    %355 = vmatprep.mubr.f32.mxu0 0.0
    %356 = vmatmul.mubr.f32.gmra.mrb[0].mxu0 %v150
    %v357 = vpop.f32.mrb[0].mxu0
    %v358 = vadd.f32 0.0, %v357
    %v359 = vpop.f32.mrb[0].mxu0
    %360 = vmatprep.mubr.f32.mxu0 0.0
    %361 = vmatmul.mubr.f32.gmra.mrb[0].mxu0 %v153
    %v362 = vpop.f32.mrb[0].mxu0
    %v363 = vadd.f32 0.0, %v362
    %v364 = vpop.f32.mrb[0].mxu0
    %365 = vmatprep.mubr.f32.mxu0 0.0
    %366 = vmatmul.mubr.f32.gmra.mrb[0].mxu0 %v156
    %v367 = vpop.f32.mrb[0].mxu0
    %v368 = vadd.f32 0.0, %v367
    %v369 = vpop.f32.mrb[0].mxu0
    %370 = vmatprep.mubr.f32.mxu0 0.0
    %371 = vmatmul.mubr.f32.gmra.mrb[0].mxu0 %v159
    %v372 = vpop.f32.mrb[0].mxu0
    %v373 = vadd.f32 0.0, %v372
    %v374 = vpop.f32.mrb[0].mxu0
    %375 = vmatprep.mubr.f32.mxu0 0.0
    %376 = vmatmul.mubr.f32.gmra.mrb[0].mxu0 %v162
    %v377 = vpop.f32.mrb[0].mxu0
    %v378 = vadd.f32 0.0, %v377
    %v379 = vpop.f32.mrb[0].mxu0
    %380 = vmatprep.mubr.f32.mxu0 0.0
    %381 = vmatmul.mubr.f32.gmra.mrb[0].mxu0 %v165
    %v382 = vpop.f32.mrb[0].mxu0
    %v383 = vadd.f32 0.0, %v382
    %v384 = vpop.f32.mrb[0].mxu0
    %385 = vmatprep.mubr.f32.mxu0 0.0
    %386 = vmatmul.mubr.f32.gmra.mrb[0].mxu0 %v168
    %v387 = vpop.f32.mrb[0].mxu0
    %v388 = vadd.f32 0.0, %v387
    %v389 = vpop.f32.mrb[0].mxu0
    %390 = vmatprep.mubr.f32.mxu0 0.0
    %391 = vmatmul.mubr.f32.gmra.mrb[0].mxu0 %v171
    %v392 = vpop.f32.mrb[0].mxu0
    %v393 = vadd.f32 0.0, %v392
    %v394 = vpop.f32.mrb[0].mxu0
    %395 = vmatprep.mubr.f32.mxu0 0.0
    %396 = vmatmul.mubr.f32.gmra.mrb[0].mxu0 %v174
    %v397 = vpop.f32.mrb[0].mxu0
    %v398 = vadd.f32 0.0, %v397
    %v399 = vpop.f32.mrb[0].mxu0
    %400 = vdwg.mxu0
    %vm433 = vcmask 1046528
    %v434 = vrot.slane %v243, 1
    %v435 = vrot.slane %v248, 1
    %v436 = vsel %vm433, %v434, %v435
    %v437 = vrot.slane %v253, 1
    %v438 = vsel %vm433, %v435, %v437
    %v439 = vrot.slane %v258, 1
    %v440 = vsel %vm433, %v437, %v439
    %v441 = vrot.slane %v263, 1
    %v442 = vsel %vm433, %v439, %v441
    %v443 = vrot.slane %v268, 1
    %v444 = vsel %vm433, %v441, %v443
    %v445 = vrot.slane %v273, 1
    %v446 = vsel %vm433, %v443, %v445
    %v447 = vrot.slane %v278, 1
    %v448 = vsel %vm433, %v445, %v447
    %v449 = vrot.slane %v283, 1
    %v450 = vsel %vm433, %v447, %v449
    %v451 = vrot.slane %v288, 1
    %v452 = vsel %vm433, %v449, %v451
    %v453 = vrot.slane %v293, 1
    %v454 = vsel %vm433, %v451, %v453
    %v455 = vrot.slane %v298, 1
    %v456 = vsel %vm433, %v453, %v455
    %v457 = vrot.slane %v303, 1
    %v458 = vsel %vm433, %v455, %v457
    %v459 = vrot.slane %v308, 1
    %v460 = vsel %vm433, %v457, %v459
    %v461 = vrot.slane %v313, 1
    %v462 = vsel %vm433, %v459, %v461
    %v463 = vrot.slane %v318, 1
    %v464 = vsel %vm433, %v461, %v463
    %v465 = vrot.slane %v323, 1
    %v466 = vrot.slane %v328, 1
    %v467 = vsel %vm433, %v465, %v466
    %v468 = vrot.slane %v333, 1
    %v469 = vsel %vm433, %v466, %v468
    %v470 = vrot.slane %v338, 1
    %v471 = vsel %vm433, %v468, %v470
    %v472 = vrot.slane %v343, 1
    %v473 = vsel %vm433, %v470, %v472
    %v474 = vrot.slane %v348, 1
    %v475 = vsel %vm433, %v472, %v474
    %v476 = vrot.slane %v353, 1
    %v477 = vsel %vm433, %v474, %v476
    %v478 = vrot.slane %v358, 1
    %v479 = vsel %vm433, %v476, %v478
    %v480 = vrot.slane %v363, 1
    %v481 = vsel %vm433, %v478, %v480
    %v482 = vrot.slane %v368, 1
    %v483 = vsel %vm433, %v480, %v482
    %v484 = vrot.slane %v373, 1
    %v485 = vsel %vm433, %v482, %v484
    %v486 = vrot.slane %v378, 1
    %v487 = vsel %vm433, %v484, %v486
    %v488 = vrot.slane %v383, 1
    %v489 = vsel %vm433, %v486, %v488
    %v490 = vrot.slane %v388, 1
    %v491 = vsel %vm433, %v488, %v490
    %v492 = vrot.slane %v393, 1
    %v493 = vsel %vm433, %v490, %v492
    %v494 = vrot.slane %v398, 1
    %v495 = vsel %vm433, %v492, %v494
    %496 = vrot.lane.b32.xlu0 %v436, 126
    %v497 = vpop.permute.xlu0 %496
    %498 = vrot.lane.b32.xlu0 %v438, 126
    %v499 = vpop.permute.xlu0 %498
    %500 = vrot.lane.b32.xlu0 %v440, 126
    %v501 = vpop.permute.xlu0 %500
    %502 = vrot.lane.b32.xlu0 %v442, 126
    %v503 = vpop.permute.xlu0 %502
    %504 = vrot.lane.b32.xlu0 %v444, 126
    %v505 = vpop.permute.xlu0 %504
    %506 = vrot.lane.b32.xlu0 %v446, 126
    %v507 = vpop.permute.xlu0 %506
    %508 = vrot.lane.b32.xlu0 %v448, 126
    %v509 = vpop.permute.xlu0 %508
    %510 = vrot.lane.b32.xlu0 %v450, 126
    %v511 = vpop.permute.xlu0 %510
    %512 = vrot.lane.b32.xlu0 %v452, 126
    %v513 = vpop.permute.xlu0 %512
    %514 = vrot.lane.b32.xlu0 %v454, 126
    %v515 = vpop.permute.xlu0 %514
    %516 = vrot.lane.b32.xlu0 %v456, 126
    %v517 = vpop.permute.xlu0 %516
    %518 = vrot.lane.b32.xlu0 %v458, 126
    %v519 = vpop.permute.xlu0 %518
    %520 = vrot.lane.b32.xlu0 %v460, 126
    %v521 = vpop.permute.xlu0 %520
    %522 = vrot.lane.b32.xlu0 %v462, 126
    %v523 = vpop.permute.xlu0 %522
    %524 = vrot.lane.b32.xlu0 %v464, 126
    %v525 = vpop.permute.xlu0 %524
    %526 = vrot.lane.b32.xlu0 %v463, 126
    %v527 = vpop.permute.xlu0 %526
    %528 = vrot.lane.b32.xlu0 %v467, 126
    %v529 = vpop.permute.xlu0 %528
    %530 = vrot.lane.b32.xlu0 %v469, 126
    %v531 = vpop.permute.xlu0 %530
    %532 = vrot.lane.b32.xlu0 %v471, 126
    %v533 = vpop.permute.xlu0 %532
    %534 = vrot.lane.b32.xlu0 %v473, 126
    %v535 = vpop.permute.xlu0 %534
    %536 = vrot.lane.b32.xlu0 %v475, 126
    %v537 = vpop.permute.xlu0 %536
    %538 = vrot.lane.b32.xlu0 %v477, 126
    %v539 = vpop.permute.xlu0 %538
    %540 = vrot.lane.b32.xlu0 %v479, 126
    %v541 = vpop.permute.xlu0 %540
    %542 = vrot.lane.b32.xlu0 %v481, 126
    %v543 = vpop.permute.xlu0 %542
    %544 = vrot.lane.b32.xlu0 %v483, 126
    %v545 = vpop.permute.xlu0 %544
    %546 = vrot.lane.b32.xlu0 %v485, 126
    %v547 = vpop.permute.xlu0 %546
    %548 = vrot.lane.b32.xlu0 %v487, 126
    %v549 = vpop.permute.xlu0 %548
    %550 = vrot.lane.b32.xlu0 %v489, 126
    %v551 = vpop.permute.xlu0 %550
    %552 = vrot.lane.b32.xlu0 %v491, 126
    %v553 = vpop.permute.xlu0 %552
    %554 = vrot.lane.b32.xlu0 %v493, 126
    %v555 = vpop.permute.xlu0 %554
    %556 = vrot.lane.b32.xlu0 %v495, 126
    %v557 = vpop.permute.xlu0 %556
    %558 = vrot.lane.b32.xlu0 %v494, 126
    %v559 = vpop.permute.xlu0 %558
    %v592 = vadd.f32 %v243, %v497
    %v593 = vadd.f32 %v248, %v499
    %v594 = vadd.f32 %v253, %v501
    %v595 = vadd.f32 %v258, %v503
    %v596 = vadd.f32 %v263, %v505
    %v597 = vadd.f32 %v268, %v507
    %v598 = vadd.f32 %v273, %v509
    %v599 = vadd.f32 %v278, %v511
    %v600 = vadd.f32 %v283, %v513
    %v601 = vadd.f32 %v288, %v515
    %v602 = vadd.f32 %v293, %v517
    %v603 = vadd.f32 %v298, %v519
    %v604 = vadd.f32 %v303, %v521
    %v605 = vadd.f32 %v308, %v523
    %v606 = vadd.f32 %v313, %v525
    %v607 = vadd.f32 %v318, %v527
    %v608 = vadd.f32 %v323, %v529
    %v609 = vadd.f32 %v328, %v531
    %v610 = vadd.f32 %v333, %v533
    %v611 = vadd.f32 %v338, %v535
    %v612 = vadd.f32 %v343, %v537
    %v613 = vadd.f32 %v348, %v539
    %v614 = vadd.f32 %v353, %v541
    %v615 = vadd.f32 %v358, %v543
    %v616 = vadd.f32 %v363, %v545
    %v617 = vadd.f32 %v368, %v547
    %v618 = vadd.f32 %v373, %v549
    %v619 = vadd.f32 %v378, %v551
    %v620 = vadd.f32 %v383, %v553
    %v621 = vadd.f32 %v388, %v555
    %v622 = vadd.f32 %v393, %v557
    %v623 = vadd.f32 %v398, %v559
    %v624 = vlaneseq
    %v625 = vshrl.u32 %v624, 7
    %v626 = vsub.s32 0, %v625
    %v627 = vrot.slane %v62, %v626
    %v628 = vadd.f32 %v243, %v627
    %v629 = vadd.f32 %v248, %v627
    %v630 = vadd.f32 %v253, %v627
    %v631 = vadd.f32 %v258, %v627
    %v632 = vadd.f32 %v263, %v627
    %v633 = vadd.f32 %v268, %v627
    %v634 = vadd.f32 %v273, %v627
    %v635 = vadd.f32 %v278, %v627
    %v636 = vadd.f32 %v283, %v627
    %v637 = vadd.f32 %v288, %v627
    %v638 = vadd.f32 %v293, %v627
    %v639 = vadd.f32 %v298, %v627
    %v640 = vadd.f32 %v303, %v627
    %v641 = vadd.f32 %v308, %v627
    %v642 = vadd.f32 %v313, %v627
    %v643 = vadd.f32 %v318, %v627
    %v644 = vadd.f32 %v323, %v627
    %v645 = vadd.f32 %v328, %v627
    %v646 = vadd.f32 %v333, %v627
    %v647 = vadd.f32 %v338, %v627
    %v648 = vadd.f32 %v343, %v627
    %v649 = vadd.f32 %v348, %v627
    %v650 = vadd.f32 %v353, %v627
    %v651 = vadd.f32 %v358, %v627
    %v652 = vadd.f32 %v363, %v627
    %v653 = vadd.f32 %v368, %v627
    %v654 = vadd.f32 %v373, %v627
    %v655 = vadd.f32 %v378, %v627
    %v656 = vadd.f32 %v383, %v627
    %v657 = vadd.f32 %v388, %v627
    %v658 = vadd.f32 %v393, %v627
    %v659 = vadd.f32 %v398, %v627
    %v660 = vmax.f32 %v628, 0.0
    %v661 = vmax.f32 %v629, 0.0
    %v662 = vmax.f32 %v630, 0.0
    %v663 = vmax.f32 %v631, 0.0
    %v664 = vmax.f32 %v632, 0.0
    %v665 = vmax.f32 %v633, 0.0
    %v666 = vmax.f32 %v634, 0.0
    %v667 = vmax.f32 %v635, 0.0
    %v668 = vmax.f32 %v636, 0.0
    %v669 = vmax.f32 %v637, 0.0
    %v670 = vmax.f32 %v638, 0.0
    %v671 = vmax.f32 %v639, 0.0
    %v672 = vmax.f32 %v640, 0.0
    %v673 = vmax.f32 %v641, 0.0
    %v674 = vmax.f32 %v642, 0.0
    %v675 = vmax.f32 %v643, 0.0
    %v676 = vmax.f32 %v644, 0.0
    %v677 = vmax.f32 %v645, 0.0
    %v678 = vmax.f32 %v646, 0.0
    %v679 = vmax.f32 %v647, 0.0
    %v680 = vmax.f32 %v648, 0.0
    %v681 = vmax.f32 %v649, 0.0
    %v682 = vmax.f32 %v650, 0.0
    %v683 = vmax.f32 %v651, 0.0
    %v684 = vmax.f32 %v652, 0.0
    %v685 = vmax.f32 %v653, 0.0
    %v686 = vmax.f32 %v654, 0.0
    %v687 = vmax.f32 %v655, 0.0
    %v688 = vmax.f32 %v656, 0.0
    %v689 = vmax.f32 %v657, 0.0
    %v690 = vmax.f32 %v658, 0.0
    %v691 = vmax.f32 %v659, 0.0
    %693 = vrot.lane.b32.xlu0 %v627, 2
    %v694 = vpop.permute.xlu0 %693
    %v696 = vadd.f32 %v592, %v694
    %v697 = vadd.f32 %v593, %v694
    %v698 = vadd.f32 %v594, %v694
    %v699 = vadd.f32 %v595, %v694
    %v700 = vadd.f32 %v596, %v694
    %v701 = vadd.f32 %v597, %v694
    %v702 = vadd.f32 %v598, %v694
    %v703 = vadd.f32 %v599, %v694
    %v704 = vadd.f32 %v600, %v694
    %v705 = vadd.f32 %v601, %v694
    %v706 = vadd.f32 %v602, %v694
    %v707 = vadd.f32 %v603, %v694
    %v708 = vadd.f32 %v604, %v694
    %v709 = vadd.f32 %v605, %v694
    %v710 = vadd.f32 %v606, %v694
    %v711 = vadd.f32 %v607, %v694
    %v712 = vadd.f32 %v608, %v694
    %v713 = vadd.f32 %v609, %v694
    %v714 = vadd.f32 %v610, %v694
    %v715 = vadd.f32 %v611, %v694
    %v716 = vadd.f32 %v612, %v694
    %v717 = vadd.f32 %v613, %v694
    %v718 = vadd.f32 %v614, %v694
    %v719 = vadd.f32 %v615, %v694
    %v720 = vadd.f32 %v616, %v694
    %v721 = vadd.f32 %v617, %v694
    %v722 = vadd.f32 %v618, %v694
    %v723 = vadd.f32 %v619, %v694
    %v724 = vadd.f32 %v620, %v694
    %v725 = vadd.f32 %v621, %v694
    %v726 = vadd.f32 %v622, %v694
    %v727 = vadd.f32 %v623, %v694
    %v728 = vmax.f32 %v696, 0.0
    %v729 = vmax.f32 %v697, 0.0
    %v730 = vmax.f32 %v698, 0.0
    %v731 = vmax.f32 %v699, 0.0
    %v732 = vmax.f32 %v700, 0.0
    %v733 = vmax.f32 %v701, 0.0
    %v734 = vmax.f32 %v702, 0.0
    %v735 = vmax.f32 %v703, 0.0
    %v736 = vmax.f32 %v704, 0.0
    %v737 = vmax.f32 %v705, 0.0
    %v738 = vmax.f32 %v706, 0.0
    %v739 = vmax.f32 %v707, 0.0
    %v740 = vmax.f32 %v708, 0.0
    %v741 = vmax.f32 %v709, 0.0
    %v742 = vmax.f32 %v710, 0.0
    %v743 = vmax.f32 %v711, 0.0
    %v744 = vmax.f32 %v712, 0.0
    %v745 = vmax.f32 %v713, 0.0
    %v746 = vmax.f32 %v714, 0.0
    %v747 = vmax.f32 %v715, 0.0
    %v748 = vmax.f32 %v716, 0.0
    %v749 = vmax.f32 %v717, 0.0
    %v750 = vmax.f32 %v718, 0.0
    %v751 = vmax.f32 %v719, 0.0
    %v752 = vmax.f32 %v720, 0.0
    %v753 = vmax.f32 %v721, 0.0
    %v754 = vmax.f32 %v722, 0.0
    %v755 = vmax.f32 %v723, 0.0
    %v756 = vmax.f32 %v724, 0.0
    %v757 = vmax.f32 %v725, 0.0
    %v758 = vmax.f32 %v726, 0.0
    %v759 = vmax.f32 %v727, 0.0
    %s760 = sld [smem:[#allocation2]]
    %v761 = vstv %s760
    %v762 = vmul.f32 %v761, %v660
    %v763 = vmul.f32 %v761, %v661
    %v764 = vmul.f32 %v761, %v662
    %v765 = vmul.f32 %v761, %v663
    %v766 = vmul.f32 %v761, %v664
    %v767 = vmul.f32 %v761, %v665
    %v768 = vmul.f32 %v761, %v666
    %v769 = vmul.f32 %v761, %v667
    %v770 = vmul.f32 %v761, %v668
    %v771 = vmul.f32 %v761, %v669
    %v772 = vmul.f32 %v761, %v670
    %v773 = vmul.f32 %v761, %v671
    %v774 = vmul.f32 %v761, %v672
    %v775 = vmul.f32 %v761, %v673
    %v776 = vmul.f32 %v761, %v674
    %v777 = vmul.f32 %v761, %v675
    %v778 = vmul.f32 %v761, %v676
    %v779 = vmul.f32 %v761, %v677
    %v780 = vmul.f32 %v761, %v678
    %v781 = vmul.f32 %v761, %v679
    %v782 = vmul.f32 %v761, %v680
    %v783 = vmul.f32 %v761, %v681
    %v784 = vmul.f32 %v761, %v682
    %v785 = vmul.f32 %v761, %v683
    %v786 = vmul.f32 %v761, %v684
    %v787 = vmul.f32 %v761, %v685
    %v788 = vmul.f32 %v761, %v686
    %v789 = vmul.f32 %v761, %v687
    %v790 = vmul.f32 %v761, %v688
    %v791 = vmul.f32 %v761, %v689
    %v792 = vmul.f32 %v761, %v690
    %v793 = vmul.f32 %v761, %v691
    %s794 = sld [smem:[#allocation2 + $0x1]]
    %v795 = vstv %s794
    %v796 = vmul.f32 %v795, %v660
    %v797 = vmul.f32 %v795, %v661
    %v798 = vmul.f32 %v795, %v662
    %v799 = vmul.f32 %v795, %v663
    %v800 = vmul.f32 %v795, %v664
    %v801 = vmul.f32 %v795, %v665
    %v802 = vmul.f32 %v795, %v666
    %v803 = vmul.f32 %v795, %v667
    %v804 = vmul.f32 %v795, %v668
    %v805 = vmul.f32 %v795, %v669
    %v806 = vmul.f32 %v795, %v670
    %v807 = vmul.f32 %v795, %v671
    %v808 = vmul.f32 %v795, %v672
    %v809 = vmul.f32 %v795, %v673
    %v810 = vmul.f32 %v795, %v674
    %v811 = vmul.f32 %v795, %v675
    %v812 = vmul.f32 %v795, %v676
    %v813 = vmul.f32 %v795, %v677
    %v814 = vmul.f32 %v795, %v678
    %v815 = vmul.f32 %v795, %v679
    %v816 = vmul.f32 %v795, %v680
    %v817 = vmul.f32 %v795, %v681
    %v818 = vmul.f32 %v795, %v682
    %v819 = vmul.f32 %v795, %v683
    %v820 = vmul.f32 %v795, %v684
    %v821 = vmul.f32 %v795, %v685
    %v822 = vmul.f32 %v795, %v686
    %v823 = vmul.f32 %v795, %v687
    %v824 = vmul.f32 %v795, %v688
    %v825 = vmul.f32 %v795, %v689
    %v826 = vmul.f32 %v795, %v690
    %v827 = vmul.f32 %v795, %v691
    %860 = vrot.lane.b32.xlu0 %v796, 127
    %v861 = vpop.permute.xlu0 %860
    %862 = vrot.lane.b32.xlu0 %v797, 127
    %v863 = vpop.permute.xlu0 %862
    %864 = vrot.lane.b32.xlu0 %v798, 127
    %v865 = vpop.permute.xlu0 %864
    %866 = vrot.lane.b32.xlu0 %v799, 127
    %v867 = vpop.permute.xlu0 %866
    %868 = vrot.lane.b32.xlu0 %v800, 127
    %v869 = vpop.permute.xlu0 %868
    %870 = vrot.lane.b32.xlu0 %v801, 127
    %v871 = vpop.permute.xlu0 %870
    %872 = vrot.lane.b32.xlu0 %v802, 127
    %v873 = vpop.permute.xlu0 %872
    %874 = vrot.lane.b32.xlu0 %v803, 127
    %v875 = vpop.permute.xlu0 %874
    %876 = vrot.lane.b32.xlu0 %v804, 127
    %v877 = vpop.permute.xlu0 %876
    %878 = vrot.lane.b32.xlu0 %v805, 127
    %v879 = vpop.permute.xlu0 %878
    %880 = vrot.lane.b32.xlu0 %v806, 127
    %v881 = vpop.permute.xlu0 %880
    %882 = vrot.lane.b32.xlu0 %v807, 127
    %v883 = vpop.permute.xlu0 %882
    %884 = vrot.lane.b32.xlu0 %v808, 127
    %v885 = vpop.permute.xlu0 %884
    %886 = vrot.lane.b32.xlu0 %v809, 127
    %v887 = vpop.permute.xlu0 %886
    %888 = vrot.lane.b32.xlu0 %v810, 127
    %v889 = vpop.permute.xlu0 %888
    %890 = vrot.lane.b32.xlu0 %v811, 127
    %v891 = vpop.permute.xlu0 %890
    %892 = vrot.lane.b32.xlu0 %v812, 127
    %v893 = vpop.permute.xlu0 %892
    %894 = vrot.lane.b32.xlu0 %v813, 127
    %v895 = vpop.permute.xlu0 %894
    %896 = vrot.lane.b32.xlu0 %v814, 127
    %v897 = vpop.permute.xlu0 %896
    %898 = vrot.lane.b32.xlu0 %v815, 127
    %v899 = vpop.permute.xlu0 %898
    %900 = vrot.lane.b32.xlu0 %v816, 127
    %v901 = vpop.permute.xlu0 %900
    %902 = vrot.lane.b32.xlu0 %v817, 127
    %v903 = vpop.permute.xlu0 %902
    %904 = vrot.lane.b32.xlu0 %v818, 127
    %v905 = vpop.permute.xlu0 %904
    %906 = vrot.lane.b32.xlu0 %v819, 127
    %v907 = vpop.permute.xlu0 %906
    %908 = vrot.lane.b32.xlu0 %v820, 127
    %v909 = vpop.permute.xlu0 %908
    %910 = vrot.lane.b32.xlu0 %v821, 127
    %v911 = vpop.permute.xlu0 %910
    %912 = vrot.lane.b32.xlu0 %v822, 127
    %v913 = vpop.permute.xlu0 %912
    %914 = vrot.lane.b32.xlu0 %v823, 127
    %v915 = vpop.permute.xlu0 %914
    %916 = vrot.lane.b32.xlu0 %v824, 127
    %v917 = vpop.permute.xlu0 %916
    %918 = vrot.lane.b32.xlu0 %v825, 127
    %v919 = vpop.permute.xlu0 %918
    %920 = vrot.lane.b32.xlu0 %v826, 127
    %v921 = vpop.permute.xlu0 %920
    %922 = vrot.lane.b32.xlu0 %v827, 127
    %v923 = vpop.permute.xlu0 %922
    %v956 = vadd.f32 %v762, %v861
    %v957 = vadd.f32 %v763, %v863
    %v958 = vadd.f32 %v764, %v865
    %v959 = vadd.f32 %v765, %v867
    %v960 = vadd.f32 %v766, %v869
    %v961 = vadd.f32 %v767, %v871
    %v962 = vadd.f32 %v768, %v873
    %v963 = vadd.f32 %v769, %v875
    %v964 = vadd.f32 %v770, %v877
    %v965 = vadd.f32 %v771, %v879
    %v966 = vadd.f32 %v772, %v881
    %v967 = vadd.f32 %v773, %v883
    %v968 = vadd.f32 %v774, %v885
    %v969 = vadd.f32 %v775, %v887
    %v970 = vadd.f32 %v776, %v889
    %v971 = vadd.f32 %v777, %v891
    %v972 = vadd.f32 %v778, %v893
    %v973 = vadd.f32 %v779, %v895
    %v974 = vadd.f32 %v780, %v897
    %v975 = vadd.f32 %v781, %v899
    %v976 = vadd.f32 %v782, %v901
    %v977 = vadd.f32 %v783, %v903
    %v978 = vadd.f32 %v784, %v905
    %v979 = vadd.f32 %v785, %v907
    %v980 = vadd.f32 %v786, %v909
    %v981 = vadd.f32 %v787, %v911
    %v982 = vadd.f32 %v788, %v913
    %v983 = vadd.f32 %v789, %v915
    %v984 = vadd.f32 %v790, %v917
    %v985 = vadd.f32 %v791, %v919
    %v986 = vadd.f32 %v792, %v921
    %v987 = vadd.f32 %v793, %v923
    %s988 = sld [smem:[#allocation2 + $0x2]]
    %v989 = vstv %s988
    %v990 = vmul.f32 %v989, %v728
    %v991 = vmul.f32 %v989, %v729
    %v992 = vmul.f32 %v989, %v730
    %v993 = vmul.f32 %v989, %v731
    %v994 = vmul.f32 %v989, %v732
    %v995 = vmul.f32 %v989, %v733
    %v996 = vmul.f32 %v989, %v734
    %v997 = vmul.f32 %v989, %v735
    %v998 = vmul.f32 %v989, %v736
    %v999 = vmul.f32 %v989, %v737
    %v1000 = vmul.f32 %v989, %v738
    %v1001 = vmul.f32 %v989, %v739
    %v1002 = vmul.f32 %v989, %v740
    %v1003 = vmul.f32 %v989, %v741
    %v1004 = vmul.f32 %v989, %v742
    %v1005 = vmul.f32 %v989, %v743
    %v1006 = vmul.f32 %v989, %v744
    %v1007 = vmul.f32 %v989, %v745
    %v1008 = vmul.f32 %v989, %v746
    %v1009 = vmul.f32 %v989, %v747
    %v1010 = vmul.f32 %v989, %v748
    %v1011 = vmul.f32 %v989, %v749
    %v1012 = vmul.f32 %v989, %v750
    %v1013 = vmul.f32 %v989, %v751
    %v1014 = vmul.f32 %v989, %v752
    %v1015 = vmul.f32 %v989, %v753
    %v1016 = vmul.f32 %v989, %v754
    %v1017 = vmul.f32 %v989, %v755
    %v1018 = vmul.f32 %v989, %v756
    %v1019 = vmul.f32 %v989, %v757
    %v1020 = vmul.f32 %v989, %v758
    %v1021 = vmul.f32 %v989, %v759
    %1054 = vrot.lane.b32.xlu0 %v990, 126
    %v1055 = vpop.permute.xlu0 %1054
    %1056 = vrot.lane.b32.xlu0 %v991, 126
    %v1057 = vpop.permute.xlu0 %1056
    %1058 = vrot.lane.b32.xlu0 %v992, 126
    %v1059 = vpop.permute.xlu0 %1058
    %1060 = vrot.lane.b32.xlu0 %v993, 126
    %v1061 = vpop.permute.xlu0 %1060
    %1062 = vrot.lane.b32.xlu0 %v994, 126
    %v1063 = vpop.permute.xlu0 %1062
    %1064 = vrot.lane.b32.xlu0 %v995, 126
    %v1065 = vpop.permute.xlu0 %1064
    %1066 = vrot.lane.b32.xlu0 %v996, 126
    %v1067 = vpop.permute.xlu0 %1066
    %1068 = vrot.lane.b32.xlu0 %v997, 126
    %v1069 = vpop.permute.xlu0 %1068
    %1070 = vrot.lane.b32.xlu0 %v998, 126
    %v1071 = vpop.permute.xlu0 %1070
    %1072 = vrot.lane.b32.xlu0 %v999, 126
    %v1073 = vpop.permute.xlu0 %1072
    %1074 = vrot.lane.b32.xlu0 %v1000, 126
    %v1075 = vpop.permute.xlu0 %1074
    %1076 = vrot.lane.b32.xlu0 %v1001, 126
    %v1077 = vpop.permute.xlu0 %1076
    %1078 = vrot.lane.b32.xlu0 %v1002, 126
    %v1079 = vpop.permute.xlu0 %1078
    %1080 = vrot.lane.b32.xlu0 %v1003, 126
    %v1081 = vpop.permute.xlu0 %1080
    %1082 = vrot.lane.b32.xlu0 %v1004, 126
    %v1083 = vpop.permute.xlu0 %1082
    %1084 = vrot.lane.b32.xlu0 %v1005, 126
    %v1085 = vpop.permute.xlu0 %1084
    %1086 = vrot.lane.b32.xlu0 %v1006, 126
    %v1087 = vpop.permute.xlu0 %1086
    %1088 = vrot.lane.b32.xlu0 %v1007, 126
    %v1089 = vpop.permute.xlu0 %1088
    %1090 = vrot.lane.b32.xlu0 %v1008, 126
    %v1091 = vpop.permute.xlu0 %1090
    %1092 = vrot.lane.b32.xlu0 %v1009, 126
    %v1093 = vpop.permute.xlu0 %1092
    %1094 = vrot.lane.b32.xlu0 %v1010, 126
    %v1095 = vpop.permute.xlu0 %1094
    %1096 = vrot.lane.b32.xlu0 %v1011, 126
    %v1097 = vpop.permute.xlu0 %1096
    %1098 = vrot.lane.b32.xlu0 %v1012, 126
    %v1099 = vpop.permute.xlu0 %1098
    %1100 = vrot.lane.b32.xlu0 %v1013, 126
    %v1101 = vpop.permute.xlu0 %1100
    %1102 = vrot.lane.b32.xlu0 %v1014, 126
    %v1103 = vpop.permute.xlu0 %1102
    %1104 = vrot.lane.b32.xlu0 %v1015, 126
    %v1105 = vpop.permute.xlu0 %1104
    %1106 = vrot.lane.b32.xlu0 %v1016, 126
    %v1107 = vpop.permute.xlu0 %1106
    %1108 = vrot.lane.b32.xlu0 %v1017, 126
    %v1109 = vpop.permute.xlu0 %1108
    %1110 = vrot.lane.b32.xlu0 %v1018, 126
    %v1111 = vpop.permute.xlu0 %1110
    %1112 = vrot.lane.b32.xlu0 %v1019, 126
    %v1113 = vpop.permute.xlu0 %1112
    %1114 = vrot.lane.b32.xlu0 %v1020, 126
    %v1115 = vpop.permute.xlu0 %1114
    %1116 = vrot.lane.b32.xlu0 %v1021, 126
    %v1117 = vpop.permute.xlu0 %1116
    %v1150 = vadd.f32 %v956, %v1055
    %v1151 = vadd.f32 %v957, %v1057
    %v1152 = vadd.f32 %v958, %v1059
    %v1153 = vadd.f32 %v959, %v1061
    %v1154 = vadd.f32 %v960, %v1063
    %v1155 = vadd.f32 %v961, %v1065
    %v1156 = vadd.f32 %v962, %v1067
    %v1157 = vadd.f32 %v963, %v1069
    %v1158 = vadd.f32 %v964, %v1071
    %v1159 = vadd.f32 %v965, %v1073
    %v1160 = vadd.f32 %v966, %v1075
    %v1161 = vadd.f32 %v967, %v1077
    %v1162 = vadd.f32 %v968, %v1079
    %v1163 = vadd.f32 %v969, %v1081
    %v1164 = vadd.f32 %v970, %v1083
    %v1165 = vadd.f32 %v971, %v1085
    %v1166 = vadd.f32 %v972, %v1087
    %v1167 = vadd.f32 %v973, %v1089
    %v1168 = vadd.f32 %v974, %v1091
    %v1169 = vadd.f32 %v975, %v1093
    %v1170 = vadd.f32 %v976, %v1095
    %v1171 = vadd.f32 %v977, %v1097
    %v1172 = vadd.f32 %v978, %v1099
    %v1173 = vadd.f32 %v979, %v1101
    %v1174 = vadd.f32 %v980, %v1103
    %v1175 = vadd.f32 %v981, %v1105
    %v1176 = vadd.f32 %v982, %v1107
    %v1177 = vadd.f32 %v983, %v1109
    %v1178 = vadd.f32 %v984, %v1111
    %v1179 = vadd.f32 %v985, %v1113
    %v1180 = vadd.f32 %v986, %v1115
    %v1181 = vadd.f32 %v987, %v1117
    %s1182 = sld [smem:[#allocation2 + $0x3]]
    %v1183 = vstv %s1182
    %v1184 = vmul.f32 %v1183, %v728
    %v1185 = vmul.f32 %v1183, %v729
    %v1186 = vmul.f32 %v1183, %v730
    %v1187 = vmul.f32 %v1183, %v731
    %v1188 = vmul.f32 %v1183, %v732
    %v1189 = vmul.f32 %v1183, %v733
    %v1190 = vmul.f32 %v1183, %v734
    %v1191 = vmul.f32 %v1183, %v735
    %v1192 = vmul.f32 %v1183, %v736
    %v1193 = vmul.f32 %v1183, %v737
    %v1194 = vmul.f32 %v1183, %v738
    %v1195 = vmul.f32 %v1183, %v739
    %v1196 = vmul.f32 %v1183, %v740
    %v1197 = vmul.f32 %v1183, %v741
    %v1198 = vmul.f32 %v1183, %v742
    %v1199 = vmul.f32 %v1183, %v743
    %v1200 = vmul.f32 %v1183, %v744
    %v1201 = vmul.f32 %v1183, %v745
    %v1202 = vmul.f32 %v1183, %v746
    %v1203 = vmul.f32 %v1183, %v747
    %v1204 = vmul.f32 %v1183, %v748
    %v1205 = vmul.f32 %v1183, %v749
    %v1206 = vmul.f32 %v1183, %v750
    %v1207 = vmul.f32 %v1183, %v751
    %v1208 = vmul.f32 %v1183, %v752
    %v1209 = vmul.f32 %v1183, %v753
    %v1210 = vmul.f32 %v1183, %v754
    %v1211 = vmul.f32 %v1183, %v755
    %v1212 = vmul.f32 %v1183, %v756
    %v1213 = vmul.f32 %v1183, %v757
    %v1214 = vmul.f32 %v1183, %v758
    %v1215 = vmul.f32 %v1183, %v759
    %1248 = vrot.lane.b32.xlu0 %v1184, 125
    %v1249 = vpop.permute.xlu0 %1248
    %1250 = vrot.lane.b32.xlu0 %v1185, 125
    %v1251 = vpop.permute.xlu0 %1250
    %1252 = vrot.lane.b32.xlu0 %v1186, 125
    %v1253 = vpop.permute.xlu0 %1252
    %1254 = vrot.lane.b32.xlu0 %v1187, 125
    %v1255 = vpop.permute.xlu0 %1254
    %1256 = vrot.lane.b32.xlu0 %v1188, 125
    %v1257 = vpop.permute.xlu0 %1256
    %1258 = vrot.lane.b32.xlu0 %v1189, 125
    %v1259 = vpop.permute.xlu0 %1258
    %1260 = vrot.lane.b32.xlu0 %v1190, 125
    %v1261 = vpop.permute.xlu0 %1260
    %1262 = vrot.lane.b32.xlu0 %v1191, 125
    %v1263 = vpop.permute.xlu0 %1262
    %1264 = vrot.lane.b32.xlu0 %v1192, 125
    %v1265 = vpop.permute.xlu0 %1264
    %1266 = vrot.lane.b32.xlu0 %v1193, 125
    %v1267 = vpop.permute.xlu0 %1266
    %1268 = vrot.lane.b32.xlu0 %v1194, 125
    %v1269 = vpop.permute.xlu0 %1268
    %1270 = vrot.lane.b32.xlu0 %v1195, 125
    %v1271 = vpop.permute.xlu0 %1270
    %1272 = vrot.lane.b32.xlu0 %v1196, 125
    %v1273 = vpop.permute.xlu0 %1272
    %1274 = vrot.lane.b32.xlu0 %v1197, 125
    %v1275 = vpop.permute.xlu0 %1274
    %1276 = vrot.lane.b32.xlu0 %v1198, 125
    %v1277 = vpop.permute.xlu0 %1276
    %1278 = vrot.lane.b32.xlu0 %v1199, 125
    %v1279 = vpop.permute.xlu0 %1278
    %1280 = vrot.lane.b32.xlu0 %v1200, 125
    %v1281 = vpop.permute.xlu0 %1280
    %1282 = vrot.lane.b32.xlu0 %v1201, 125
    %v1283 = vpop.permute.xlu0 %1282
    %1284 = vrot.lane.b32.xlu0 %v1202, 125
    %v1285 = vpop.permute.xlu0 %1284
    %1286 = vrot.lane.b32.xlu0 %v1203, 125
    %v1287 = vpop.permute.xlu0 %1286
    %1288 = vrot.lane.b32.xlu0 %v1204, 125
    %v1289 = vpop.permute.xlu0 %1288
    %1290 = vrot.lane.b32.xlu0 %v1205, 125
    %v1291 = vpop.permute.xlu0 %1290
    %1292 = vrot.lane.b32.xlu0 %v1206, 125
    %v1293 = vpop.permute.xlu0 %1292
    %1294 = vrot.lane.b32.xlu0 %v1207, 125
    %v1295 = vpop.permute.xlu0 %1294
    %1296 = vrot.lane.b32.xlu0 %v1208, 125
    %v1297 = vpop.permute.xlu0 %1296
    %1298 = vrot.lane.b32.xlu0 %v1209, 125
    %v1299 = vpop.permute.xlu0 %1298
    %1300 = vrot.lane.b32.xlu0 %v1210, 125
    %v1301 = vpop.permute.xlu0 %1300
    %1302 = vrot.lane.b32.xlu0 %v1211, 125
    %v1303 = vpop.permute.xlu0 %1302
    %1304 = vrot.lane.b32.xlu0 %v1212, 125
    %v1305 = vpop.permute.xlu0 %1304
    %1306 = vrot.lane.b32.xlu0 %v1213, 125
    %v1307 = vpop.permute.xlu0 %1306
    %1308 = vrot.lane.b32.xlu0 %v1214, 125
    %v1309 = vpop.permute.xlu0 %1308
    %1310 = vrot.lane.b32.xlu0 %v1215, 125
    %v1311 = vpop.permute.xlu0 %1310
    %v1344 = vadd.f32 %v1150, %v1249
    %v1345 = vadd.f32 %v1151, %v1251
    %v1346 = vadd.f32 %v1152, %v1253
    %v1347 = vadd.f32 %v1153, %v1255
    %v1348 = vadd.f32 %v1154, %v1257
    %v1349 = vadd.f32 %v1155, %v1259
    %v1350 = vadd.f32 %v1156, %v1261
    %v1351 = vadd.f32 %v1157, %v1263
    %v1352 = vadd.f32 %v1158, %v1265
    %v1353 = vadd.f32 %v1159, %v1267
    %v1354 = vadd.f32 %v1160, %v1269
    %v1355 = vadd.f32 %v1161, %v1271
    %v1356 = vadd.f32 %v1162, %v1273
    %v1357 = vadd.f32 %v1163, %v1275
    %v1358 = vadd.f32 %v1164, %v1277
    %v1359 = vadd.f32 %v1165, %v1279
    %v1360 = vadd.f32 %v1166, %v1281
    %v1361 = vadd.f32 %v1167, %v1283
    %v1362 = vadd.f32 %v1168, %v1285
    %v1363 = vadd.f32 %v1169, %v1287
    %v1364 = vadd.f32 %v1170, %v1289
    %v1365 = vadd.f32 %v1171, %v1291
    %v1366 = vadd.f32 %v1172, %v1293
    %v1367 = vadd.f32 %v1173, %v1295
    %v1368 = vadd.f32 %v1174, %v1297
    %v1369 = vadd.f32 %v1175, %v1299
    %v1370 = vadd.f32 %v1176, %v1301
    %v1371 = vadd.f32 %v1177, %v1303
    %v1372 = vadd.f32 %v1178, %v1305
    %v1373 = vadd.f32 %v1179, %v1307
    %v1374 = vadd.f32 %v1180, %v1309
    %v1375 = vadd.f32 %v1181, %v1311
    %s1376 = sld [smem:[#allocation2 + $0x4]]
    %v1377 = vstv %s1376
    %v1378 = vmul.f32 %v1377, %v660
    %v1379 = vmul.f32 %v1377, %v661
    %v1380 = vmul.f32 %v1377, %v662
    %v1381 = vmul.f32 %v1377, %v663
    %v1382 = vmul.f32 %v1377, %v664
    %v1383 = vmul.f32 %v1377, %v665
    %v1384 = vmul.f32 %v1377, %v666
    %v1385 = vmul.f32 %v1377, %v667
    %v1386 = vmul.f32 %v1377, %v668
    %v1387 = vmul.f32 %v1377, %v669
    %v1388 = vmul.f32 %v1377, %v670
    %v1389 = vmul.f32 %v1377, %v671
    %v1390 = vmul.f32 %v1377, %v672
    %v1391 = vmul.f32 %v1377, %v673
    %v1392 = vmul.f32 %v1377, %v674
    %v1393 = vmul.f32 %v1377, %v675
    %v1394 = vmul.f32 %v1377, %v676
    %v1395 = vmul.f32 %v1377, %v677
    %v1396 = vmul.f32 %v1377, %v678
    %v1397 = vmul.f32 %v1377, %v679
    %v1398 = vmul.f32 %v1377, %v680
    %v1399 = vmul.f32 %v1377, %v681
    %v1400 = vmul.f32 %v1377, %v682
    %v1401 = vmul.f32 %v1377, %v683
    %v1402 = vmul.f32 %v1377, %v684
    %v1403 = vmul.f32 %v1377, %v685
    %v1404 = vmul.f32 %v1377, %v686
    %v1405 = vmul.f32 %v1377, %v687
    %v1406 = vmul.f32 %v1377, %v688
    %v1407 = vmul.f32 %v1377, %v689
    %v1408 = vmul.f32 %v1377, %v690
    %v1409 = vmul.f32 %v1377, %v691
    %s1410 = sld [smem:[#allocation2 + $0x5]]
    %v1411 = vstv %s1410
    %v1412 = vmul.f32 %v1411, %v660
    %v1413 = vmul.f32 %v1411, %v661
    %v1414 = vmul.f32 %v1411, %v662
    %v1415 = vmul.f32 %v1411, %v663
    %v1416 = vmul.f32 %v1411, %v664
    %v1417 = vmul.f32 %v1411, %v665
    %v1418 = vmul.f32 %v1411, %v666
    %v1419 = vmul.f32 %v1411, %v667
    %v1420 = vmul.f32 %v1411, %v668
    %v1421 = vmul.f32 %v1411, %v669
    %v1422 = vmul.f32 %v1411, %v670
    %v1423 = vmul.f32 %v1411, %v671
    %v1424 = vmul.f32 %v1411, %v672
    %v1425 = vmul.f32 %v1411, %v673
    %v1426 = vmul.f32 %v1411, %v674
    %v1427 = vmul.f32 %v1411, %v675
    %v1428 = vmul.f32 %v1411, %v676
    %v1429 = vmul.f32 %v1411, %v677
    %v1430 = vmul.f32 %v1411, %v678
    %v1431 = vmul.f32 %v1411, %v679
    %v1432 = vmul.f32 %v1411, %v680
    %v1433 = vmul.f32 %v1411, %v681
    %v1434 = vmul.f32 %v1411, %v682
    %v1435 = vmul.f32 %v1411, %v683
    %v1436 = vmul.f32 %v1411, %v684
    %v1437 = vmul.f32 %v1411, %v685
    %v1438 = vmul.f32 %v1411, %v686
    %v1439 = vmul.f32 %v1411, %v687
    %v1440 = vmul.f32 %v1411, %v688
    %v1441 = vmul.f32 %v1411, %v689
    %v1442 = vmul.f32 %v1411, %v690
    %v1443 = vmul.f32 %v1411, %v691
    %1476 = vrot.lane.b32.xlu0 %v1412, 127
    %v1477 = vpop.permute.xlu0 %1476
    %1478 = vrot.lane.b32.xlu0 %v1413, 127
    %v1479 = vpop.permute.xlu0 %1478
    %1480 = vrot.lane.b32.xlu0 %v1414, 127
    %v1481 = vpop.permute.xlu0 %1480
    %1482 = vrot.lane.b32.xlu0 %v1415, 127
    %v1483 = vpop.permute.xlu0 %1482
    %1484 = vrot.lane.b32.xlu0 %v1416, 127
    %v1485 = vpop.permute.xlu0 %1484
    %1486 = vrot.lane.b32.xlu0 %v1417, 127
    %v1487 = vpop.permute.xlu0 %1486
    %1488 = vrot.lane.b32.xlu0 %v1418, 127
    %v1489 = vpop.permute.xlu0 %1488
    %1490 = vrot.lane.b32.xlu0 %v1419, 127
    %v1491 = vpop.permute.xlu0 %1490
    %1492 = vrot.lane.b32.xlu0 %v1420, 127
    %v1493 = vpop.permute.xlu0 %1492
    %1494 = vrot.lane.b32.xlu0 %v1421, 127
    %v1495 = vpop.permute.xlu0 %1494
    %1496 = vrot.lane.b32.xlu0 %v1422, 127
    %v1497 = vpop.permute.xlu0 %1496
    %1498 = vrot.lane.b32.xlu0 %v1423, 127
    %v1499 = vpop.permute.xlu0 %1498
    %1500 = vrot.lane.b32.xlu0 %v1424, 127
    %v1501 = vpop.permute.xlu0 %1500
    %1502 = vrot.lane.b32.xlu0 %v1425, 127
    %v1503 = vpop.permute.xlu0 %1502
    %1504 = vrot.lane.b32.xlu0 %v1426, 127
    %v1505 = vpop.permute.xlu0 %1504
    %1506 = vrot.lane.b32.xlu0 %v1427, 127
    %v1507 = vpop.permute.xlu0 %1506
    %1508 = vrot.lane.b32.xlu0 %v1428, 127
    %v1509 = vpop.permute.xlu0 %1508
    %1510 = vrot.lane.b32.xlu0 %v1429, 127
    %v1511 = vpop.permute.xlu0 %1510
    %1512 = vrot.lane.b32.xlu0 %v1430, 127
    %v1513 = vpop.permute.xlu0 %1512
    %1514 = vrot.lane.b32.xlu0 %v1431, 127
    %v1515 = vpop.permute.xlu0 %1514
    %1516 = vrot.lane.b32.xlu0 %v1432, 127
    %v1517 = vpop.permute.xlu0 %1516
    %1518 = vrot.lane.b32.xlu0 %v1433, 127
    %v1519 = vpop.permute.xlu0 %1518
    %1520 = vrot.lane.b32.xlu0 %v1434, 127
    %v1521 = vpop.permute.xlu0 %1520
    %1522 = vrot.lane.b32.xlu0 %v1435, 127
    %v1523 = vpop.permute.xlu0 %1522
    %1524 = vrot.lane.b32.xlu0 %v1436, 127
    %v1525 = vpop.permute.xlu0 %1524
    %1526 = vrot.lane.b32.xlu0 %v1437, 127
    %v1527 = vpop.permute.xlu0 %1526
    %1528 = vrot.lane.b32.xlu0 %v1438, 127
    %v1529 = vpop.permute.xlu0 %1528
    %1530 = vrot.lane.b32.xlu0 %v1439, 127
    %v1531 = vpop.permute.xlu0 %1530
    %1532 = vrot.lane.b32.xlu0 %v1440, 127
    %v1533 = vpop.permute.xlu0 %1532
    %1534 = vrot.lane.b32.xlu0 %v1441, 127
    %v1535 = vpop.permute.xlu0 %1534
    %1536 = vrot.lane.b32.xlu0 %v1442, 127
    %v1537 = vpop.permute.xlu0 %1536
    %1538 = vrot.lane.b32.xlu0 %v1443, 127
    %v1539 = vpop.permute.xlu0 %1538
    %v1572 = vadd.f32 %v1378, %v1477
    %v1573 = vadd.f32 %v1379, %v1479
    %v1574 = vadd.f32 %v1380, %v1481
    %v1575 = vadd.f32 %v1381, %v1483
    %v1576 = vadd.f32 %v1382, %v1485
    %v1577 = vadd.f32 %v1383, %v1487
    %v1578 = vadd.f32 %v1384, %v1489
    %v1579 = vadd.f32 %v1385, %v1491
    %v1580 = vadd.f32 %v1386, %v1493
    %v1581 = vadd.f32 %v1387, %v1495
    %v1582 = vadd.f32 %v1388, %v1497
    %v1583 = vadd.f32 %v1389, %v1499
    %v1584 = vadd.f32 %v1390, %v1501
    %v1585 = vadd.f32 %v1391, %v1503
    %v1586 = vadd.f32 %v1392, %v1505
    %v1587 = vadd.f32 %v1393, %v1507
    %v1588 = vadd.f32 %v1394, %v1509
    %v1589 = vadd.f32 %v1395, %v1511
    %v1590 = vadd.f32 %v1396, %v1513
    %v1591 = vadd.f32 %v1397, %v1515
    %v1592 = vadd.f32 %v1398, %v1517
    %v1593 = vadd.f32 %v1399, %v1519
    %v1594 = vadd.f32 %v1400, %v1521
    %v1595 = vadd.f32 %v1401, %v1523
    %v1596 = vadd.f32 %v1402, %v1525
    %v1597 = vadd.f32 %v1403, %v1527
    %v1598 = vadd.f32 %v1404, %v1529
    %v1599 = vadd.f32 %v1405, %v1531
    %v1600 = vadd.f32 %v1406, %v1533
    %v1601 = vadd.f32 %v1407, %v1535
    %v1602 = vadd.f32 %v1408, %v1537
    %v1603 = vadd.f32 %v1409, %v1539
    %s1604 = sld [smem:[#allocation2 + $0x6]]
    %v1605 = vstv %s1604
    %v1606 = vmul.f32 %v1605, %v728
    %v1607 = vmul.f32 %v1605, %v729
    %v1608 = vmul.f32 %v1605, %v730
    %v1609 = vmul.f32 %v1605, %v731
    %v1610 = vmul.f32 %v1605, %v732
    %v1611 = vmul.f32 %v1605, %v733
    %v1612 = vmul.f32 %v1605, %v734
    %v1613 = vmul.f32 %v1605, %v735
    %v1614 = vmul.f32 %v1605, %v736
    %v1615 = vmul.f32 %v1605, %v737
    %v1616 = vmul.f32 %v1605, %v738
    %v1617 = vmul.f32 %v1605, %v739
    %v1618 = vmul.f32 %v1605, %v740
    %v1619 = vmul.f32 %v1605, %v741
    %v1620 = vmul.f32 %v1605, %v742
    %v1621 = vmul.f32 %v1605, %v743
    %v1622 = vmul.f32 %v1605, %v744
    %v1623 = vmul.f32 %v1605, %v745
    %v1624 = vmul.f32 %v1605, %v746
    %v1625 = vmul.f32 %v1605, %v747
    %v1626 = vmul.f32 %v1605, %v748
    %v1627 = vmul.f32 %v1605, %v749
    %v1628 = vmul.f32 %v1605, %v750
    %v1629 = vmul.f32 %v1605, %v751
    %v1630 = vmul.f32 %v1605, %v752
    %v1631 = vmul.f32 %v1605, %v753
    %v1632 = vmul.f32 %v1605, %v754
    %v1633 = vmul.f32 %v1605, %v755
    %v1634 = vmul.f32 %v1605, %v756
    %v1635 = vmul.f32 %v1605, %v757
    %v1636 = vmul.f32 %v1605, %v758
    %v1637 = vmul.f32 %v1605, %v759
    %1670 = vrot.lane.b32.xlu0 %v1606, 126
    %v1671 = vpop.permute.xlu0 %1670
    %1672 = vrot.lane.b32.xlu0 %v1607, 126
    %v1673 = vpop.permute.xlu0 %1672
    %1674 = vrot.lane.b32.xlu0 %v1608, 126
    %v1675 = vpop.permute.xlu0 %1674
    %1676 = vrot.lane.b32.xlu0 %v1609, 126
    %v1677 = vpop.permute.xlu0 %1676
    %1678 = vrot.lane.b32.xlu0 %v1610, 126
    %v1679 = vpop.permute.xlu0 %1678
    %1680 = vrot.lane.b32.xlu0 %v1611, 126
    %v1681 = vpop.permute.xlu0 %1680
    %1682 = vrot.lane.b32.xlu0 %v1612, 126
    %v1683 = vpop.permute.xlu0 %1682
    %1684 = vrot.lane.b32.xlu0 %v1613, 126
    %v1685 = vpop.permute.xlu0 %1684
    %1686 = vrot.lane.b32.xlu0 %v1614, 126
    %v1687 = vpop.permute.xlu0 %1686
    %1688 = vrot.lane.b32.xlu0 %v1615, 126
    %v1689 = vpop.permute.xlu0 %1688
    %1690 = vrot.lane.b32.xlu0 %v1616, 126
    %v1691 = vpop.permute.xlu0 %1690
    %1692 = vrot.lane.b32.xlu0 %v1617, 126
    %v1693 = vpop.permute.xlu0 %1692
    %1694 = vrot.lane.b32.xlu0 %v1618, 126
    %v1695 = vpop.permute.xlu0 %1694
    %1696 = vrot.lane.b32.xlu0 %v1619, 126
    %v1697 = vpop.permute.xlu0 %1696
    %1698 = vrot.lane.b32.xlu0 %v1620, 126
    %v1699 = vpop.permute.xlu0 %1698
    %1700 = vrot.lane.b32.xlu0 %v1621, 126
    %v1701 = vpop.permute.xlu0 %1700
    %1702 = vrot.lane.b32.xlu0 %v1622, 126
    %v1703 = vpop.permute.xlu0 %1702
    %1704 = vrot.lane.b32.xlu0 %v1623, 126
    %v1705 = vpop.permute.xlu0 %1704
    %1706 = vrot.lane.b32.xlu0 %v1624, 126
    %v1707 = vpop.permute.xlu0 %1706
    %1708 = vrot.lane.b32.xlu0 %v1625, 126
    %v1709 = vpop.permute.xlu0 %1708
    %1710 = vrot.lane.b32.xlu0 %v1626, 126
    %v1711 = vpop.permute.xlu0 %1710
    %1712 = vrot.lane.b32.xlu0 %v1627, 126
    %v1713 = vpop.permute.xlu0 %1712
    %1714 = vrot.lane.b32.xlu0 %v1628, 126
    %v1715 = vpop.permute.xlu0 %1714
    %1716 = vrot.lane.b32.xlu0 %v1629, 126
    %v1717 = vpop.permute.xlu0 %1716
    %1718 = vrot.lane.b32.xlu0 %v1630, 126
    %v1719 = vpop.permute.xlu0 %1718
    %1720 = vrot.lane.b32.xlu0 %v1631, 126
    %v1721 = vpop.permute.xlu0 %1720
    %1722 = vrot.lane.b32.xlu0 %v1632, 126
    %v1723 = vpop.permute.xlu0 %1722
    %1724 = vrot.lane.b32.xlu0 %v1633, 126
    %v1725 = vpop.permute.xlu0 %1724
    %1726 = vrot.lane.b32.xlu0 %v1634, 126
    %v1727 = vpop.permute.xlu0 %1726
    %1728 = vrot.lane.b32.xlu0 %v1635, 126
    %v1729 = vpop.permute.xlu0 %1728
    %1730 = vrot.lane.b32.xlu0 %v1636, 126
    %v1731 = vpop.permute.xlu0 %1730
    %1732 = vrot.lane.b32.xlu0 %v1637, 126
    %v1733 = vpop.permute.xlu0 %1732
    %v1766 = vadd.f32 %v1572, %v1671
    %v1767 = vadd.f32 %v1573, %v1673
    %v1768 = vadd.f32 %v1574, %v1675
    %v1769 = vadd.f32 %v1575, %v1677
    %v1770 = vadd.f32 %v1576, %v1679
    %v1771 = vadd.f32 %v1577, %v1681
    %v1772 = vadd.f32 %v1578, %v1683
    %v1773 = vadd.f32 %v1579, %v1685
    %v1774 = vadd.f32 %v1580, %v1687
    %v1775 = vadd.f32 %v1581, %v1689
    %v1776 = vadd.f32 %v1582, %v1691
    %v1777 = vadd.f32 %v1583, %v1693
    %v1778 = vadd.f32 %v1584, %v1695
    %v1779 = vadd.f32 %v1585, %v1697
    %v1780 = vadd.f32 %v1586, %v1699
    %v1781 = vadd.f32 %v1587, %v1701
    %v1782 = vadd.f32 %v1588, %v1703
    %v1783 = vadd.f32 %v1589, %v1705
    %v1784 = vadd.f32 %v1590, %v1707
    %v1785 = vadd.f32 %v1591, %v1709
    %v1786 = vadd.f32 %v1592, %v1711
    %v1787 = vadd.f32 %v1593, %v1713
    %v1788 = vadd.f32 %v1594, %v1715
    %v1789 = vadd.f32 %v1595, %v1717
    %v1790 = vadd.f32 %v1596, %v1719
    %v1791 = vadd.f32 %v1597, %v1721
    %v1792 = vadd.f32 %v1598, %v1723
    %v1793 = vadd.f32 %v1599, %v1725
    %v1794 = vadd.f32 %v1600, %v1727
    %v1795 = vadd.f32 %v1601, %v1729
    %v1796 = vadd.f32 %v1602, %v1731
    %v1797 = vadd.f32 %v1603, %v1733
    %s1798 = sld [smem:[#allocation2 + $0x7]]
    %v1799 = vstv %s1798
    %v1800 = vmul.f32 %v1799, %v728
    %v1801 = vmul.f32 %v1799, %v729
    %v1802 = vmul.f32 %v1799, %v730
    %v1803 = vmul.f32 %v1799, %v731
    %v1804 = vmul.f32 %v1799, %v732
    %v1805 = vmul.f32 %v1799, %v733
    %v1806 = vmul.f32 %v1799, %v734
    %v1807 = vmul.f32 %v1799, %v735
    %v1808 = vmul.f32 %v1799, %v736
    %v1809 = vmul.f32 %v1799, %v737
    %v1810 = vmul.f32 %v1799, %v738
    %v1811 = vmul.f32 %v1799, %v739
    %v1812 = vmul.f32 %v1799, %v740
    %v1813 = vmul.f32 %v1799, %v741
    %v1814 = vmul.f32 %v1799, %v742
    %v1815 = vmul.f32 %v1799, %v743
    %v1816 = vmul.f32 %v1799, %v744
    %v1817 = vmul.f32 %v1799, %v745
    %v1818 = vmul.f32 %v1799, %v746
    %v1819 = vmul.f32 %v1799, %v747
    %v1820 = vmul.f32 %v1799, %v748
    %v1821 = vmul.f32 %v1799, %v749
    %v1822 = vmul.f32 %v1799, %v750
    %v1823 = vmul.f32 %v1799, %v751
    %v1824 = vmul.f32 %v1799, %v752
    %v1825 = vmul.f32 %v1799, %v753
    %v1826 = vmul.f32 %v1799, %v754
    %v1827 = vmul.f32 %v1799, %v755
    %v1828 = vmul.f32 %v1799, %v756
    %v1829 = vmul.f32 %v1799, %v757
    %v1830 = vmul.f32 %v1799, %v758
    %v1831 = vmul.f32 %v1799, %v759
    %1864 = vrot.lane.b32.xlu0 %v1800, 125
    %v1865 = vpop.permute.xlu0 %1864
    %1866 = vrot.lane.b32.xlu0 %v1801, 125
    %v1867 = vpop.permute.xlu0 %1866
    %1868 = vrot.lane.b32.xlu0 %v1802, 125
    %v1869 = vpop.permute.xlu0 %1868
    %1870 = vrot.lane.b32.xlu0 %v1803, 125
    %v1871 = vpop.permute.xlu0 %1870
    %1872 = vrot.lane.b32.xlu0 %v1804, 125
    %v1873 = vpop.permute.xlu0 %1872
    %1874 = vrot.lane.b32.xlu0 %v1805, 125
    %v1875 = vpop.permute.xlu0 %1874
    %1876 = vrot.lane.b32.xlu0 %v1806, 125
    %v1877 = vpop.permute.xlu0 %1876
    %1878 = vrot.lane.b32.xlu0 %v1807, 125
    %v1879 = vpop.permute.xlu0 %1878
    %1880 = vrot.lane.b32.xlu0 %v1808, 125
    %v1881 = vpop.permute.xlu0 %1880
    %1882 = vrot.lane.b32.xlu0 %v1809, 125
    %v1883 = vpop.permute.xlu0 %1882
    %1884 = vrot.lane.b32.xlu0 %v1810, 125
    %v1885 = vpop.permute.xlu0 %1884
    %1886 = vrot.lane.b32.xlu0 %v1811, 125
    %v1887 = vpop.permute.xlu0 %1886
    %1888 = vrot.lane.b32.xlu0 %v1812, 125
    %v1889 = vpop.permute.xlu0 %1888
    %1890 = vrot.lane.b32.xlu0 %v1813, 125
    %v1891 = vpop.permute.xlu0 %1890
    %1892 = vrot.lane.b32.xlu0 %v1814, 125
    %v1893 = vpop.permute.xlu0 %1892
    %1894 = vrot.lane.b32.xlu0 %v1815, 125
    %v1895 = vpop.permute.xlu0 %1894
    %1896 = vrot.lane.b32.xlu0 %v1816, 125
    %v1897 = vpop.permute.xlu0 %1896
    %1898 = vrot.lane.b32.xlu0 %v1817, 125
    %v1899 = vpop.permute.xlu0 %1898
    %1900 = vrot.lane.b32.xlu0 %v1818, 125
    %v1901 = vpop.permute.xlu0 %1900
    %1902 = vrot.lane.b32.xlu0 %v1819, 125
    %v1903 = vpop.permute.xlu0 %1902
    %1904 = vrot.lane.b32.xlu0 %v1820, 125
    %v1905 = vpop.permute.xlu0 %1904
    %1906 = vrot.lane.b32.xlu0 %v1821, 125
    %v1907 = vpop.permute.xlu0 %1906
    %1908 = vrot.lane.b32.xlu0 %v1822, 125
    %v1909 = vpop.permute.xlu0 %1908
    %1910 = vrot.lane.b32.xlu0 %v1823, 125
    %v1911 = vpop.permute.xlu0 %1910
    %1912 = vrot.lane.b32.xlu0 %v1824, 125
    %v1913 = vpop.permute.xlu0 %1912
    %1914 = vrot.lane.b32.xlu0 %v1825, 125
    %v1915 = vpop.permute.xlu0 %1914
    %1916 = vrot.lane.b32.xlu0 %v1826, 125
    %v1917 = vpop.permute.xlu0 %1916
    %1918 = vrot.lane.b32.xlu0 %v1827, 125
    %v1919 = vpop.permute.xlu0 %1918
    %1920 = vrot.lane.b32.xlu0 %v1828, 125
    %v1921 = vpop.permute.xlu0 %1920
    %1922 = vrot.lane.b32.xlu0 %v1829, 125
    %v1923 = vpop.permute.xlu0 %1922
    %1924 = vrot.lane.b32.xlu0 %v1830, 125
    %v1925 = vpop.permute.xlu0 %1924
    %1926 = vrot.lane.b32.xlu0 %v1831, 125
    %v1927 = vpop.permute.xlu0 %1926
    %v1960 = vadd.f32 %v1766, %v1865
    %v1961 = vadd.f32 %v1767, %v1867
    %v1962 = vadd.f32 %v1768, %v1869
    %v1963 = vadd.f32 %v1769, %v1871
    %v1964 = vadd.f32 %v1770, %v1873
    %v1965 = vadd.f32 %v1771, %v1875
    %v1966 = vadd.f32 %v1772, %v1877
    %v1967 = vadd.f32 %v1773, %v1879
    %v1968 = vadd.f32 %v1774, %v1881
    %v1969 = vadd.f32 %v1775, %v1883
    %v1970 = vadd.f32 %v1776, %v1885
    %v1971 = vadd.f32 %v1777, %v1887
    %v1972 = vadd.f32 %v1778, %v1889
    %v1973 = vadd.f32 %v1779, %v1891
    %v1974 = vadd.f32 %v1780, %v1893
    %v1975 = vadd.f32 %v1781, %v1895
    %v1976 = vadd.f32 %v1782, %v1897
    %v1977 = vadd.f32 %v1783, %v1899
    %v1978 = vadd.f32 %v1784, %v1901
    %v1979 = vadd.f32 %v1785, %v1903
    %v1980 = vadd.f32 %v1786, %v1905
    %v1981 = vadd.f32 %v1787, %v1907
    %v1982 = vadd.f32 %v1788, %v1909
    %v1983 = vadd.f32 %v1789, %v1911
    %v1984 = vadd.f32 %v1790, %v1913
    %v1985 = vadd.f32 %v1791, %v1915
    %v1986 = vadd.f32 %v1792, %v1917
    %v1987 = vadd.f32 %v1793, %v1919
    %v1988 = vadd.f32 %v1794, %v1921
    %v1989 = vadd.f32 %v1795, %v1923
    %v1990 = vadd.f32 %v1796, %v1925
    %v1991 = vadd.f32 %v1797, %v1927
    %v2024 = vrot.slane %v1960, 1
    %v2025 = vrot.slane %v1961, 1
    %v2026 = vsel %vm433, %v2024, %v2025
    %v2027 = vrot.slane %v1962, 1
    %v2028 = vsel %vm433, %v2025, %v2027
    %v2029 = vrot.slane %v1963, 1
    %v2030 = vsel %vm433, %v2027, %v2029
    %v2031 = vrot.slane %v1964, 1
    %v2032 = vsel %vm433, %v2029, %v2031
    %v2033 = vrot.slane %v1965, 1
    %v2034 = vsel %vm433, %v2031, %v2033
    %v2035 = vrot.slane %v1966, 1
    %v2036 = vsel %vm433, %v2033, %v2035
    %v2037 = vrot.slane %v1967, 1
    %v2038 = vsel %vm433, %v2035, %v2037
    %v2039 = vrot.slane %v1968, 1
    %v2040 = vsel %vm433, %v2037, %v2039
    %v2041 = vrot.slane %v1969, 1
    %v2042 = vsel %vm433, %v2039, %v2041
    %v2043 = vrot.slane %v1970, 1
    %v2044 = vsel %vm433, %v2041, %v2043
    %v2045 = vrot.slane %v1971, 1
    %v2046 = vsel %vm433, %v2043, %v2045
    %v2047 = vrot.slane %v1972, 1
    %v2048 = vsel %vm433, %v2045, %v2047
    %v2049 = vrot.slane %v1973, 1
    %v2050 = vsel %vm433, %v2047, %v2049
    %v2051 = vrot.slane %v1974, 1
    %v2052 = vsel %vm433, %v2049, %v2051
    %v2053 = vrot.slane %v1975, 1
    %v2054 = vsel %vm433, %v2051, %v2053
    %v2055 = vrot.slane %v1976, 1
    %v2056 = vrot.slane %v1977, 1
    %v2057 = vsel %vm433, %v2055, %v2056
    %v2058 = vrot.slane %v1978, 1
    %v2059 = vsel %vm433, %v2056, %v2058
    %v2060 = vrot.slane %v1979, 1
    %v2061 = vsel %vm433, %v2058, %v2060
    %v2062 = vrot.slane %v1980, 1
    %v2063 = vsel %vm433, %v2060, %v2062
    %v2064 = vrot.slane %v1981, 1
    %v2065 = vsel %vm433, %v2062, %v2064
    %v2066 = vrot.slane %v1982, 1
    %v2067 = vsel %vm433, %v2064, %v2066
    %v2068 = vrot.slane %v1983, 1
    %v2069 = vsel %vm433, %v2066, %v2068
    %v2070 = vrot.slane %v1984, 1
    %v2071 = vsel %vm433, %v2068, %v2070
    %v2072 = vrot.slane %v1985, 1
    %v2073 = vsel %vm433, %v2070, %v2072
    %v2074 = vrot.slane %v1986, 1
    %v2075 = vsel %vm433, %v2072, %v2074
    %v2076 = vrot.slane %v1987, 1
    %v2077 = vsel %vm433, %v2074, %v2076
    %v2078 = vrot.slane %v1988, 1
    %v2079 = vsel %vm433, %v2076, %v2078
    %v2080 = vrot.slane %v1989, 1
    %v2081 = vsel %vm433, %v2078, %v2080
    %v2082 = vrot.slane %v1990, 1
    %v2083 = vsel %vm433, %v2080, %v2082
    %v2084 = vrot.slane %v1991, 1
    %v2085 = vsel %vm433, %v2082, %v2084
    %v2118 = vadd.f32 %v1344, %v2026
    %v2119 = vadd.f32 %v1345, %v2028
    %v2120 = vadd.f32 %v1346, %v2030
    %v2121 = vadd.f32 %v1347, %v2032
    %v2122 = vadd.f32 %v1348, %v2034
    %v2123 = vadd.f32 %v1349, %v2036
    %v2124 = vadd.f32 %v1350, %v2038
    %v2125 = vadd.f32 %v1351, %v2040
    %v2126 = vadd.f32 %v1352, %v2042
    %v2127 = vadd.f32 %v1353, %v2044
    %v2128 = vadd.f32 %v1354, %v2046
    %v2129 = vadd.f32 %v1355, %v2048
    %v2130 = vadd.f32 %v1356, %v2050
    %v2131 = vadd.f32 %v1357, %v2052
    %v2132 = vadd.f32 %v1358, %v2054
    %v2133 = vadd.f32 %v1359, %v2053
    %v2134 = vadd.f32 %v1360, %v2057
    %v2135 = vadd.f32 %v1361, %v2059
    %v2136 = vadd.f32 %v1362, %v2061
    %v2137 = vadd.f32 %v1363, %v2063
    %v2138 = vadd.f32 %v1364, %v2065
    %v2139 = vadd.f32 %v1365, %v2067
    %v2140 = vadd.f32 %v1366, %v2069
    %v2141 = vadd.f32 %v1367, %v2071
    %v2142 = vadd.f32 %v1368, %v2073
    %v2143 = vadd.f32 %v1369, %v2075
    %v2144 = vadd.f32 %v1370, %v2077
    %v2145 = vadd.f32 %v1371, %v2079
    %v2146 = vadd.f32 %v1372, %v2081
    %v2147 = vadd.f32 %v1373, %v2083
    %v2148 = vadd.f32 %v1374, %v2085
    %v2149 = vadd.f32 %v1375, %v2084
    %s2150 = sld [smem:[#allocation2 + $0x8]]
    %v2151 = vstv %s2150
    %v2152 = vadd.f32 %v2118, %v2151
    %v2153 = vadd.f32 %v2119, %v2151
    %v2154 = vadd.f32 %v2120, %v2151
    %v2155 = vadd.f32 %v2121, %v2151
    %v2156 = vadd.f32 %v2122, %v2151
    %v2157 = vadd.f32 %v2123, %v2151
    %v2158 = vadd.f32 %v2124, %v2151
    %v2159 = vadd.f32 %v2125, %v2151
    %v2160 = vadd.f32 %v2126, %v2151
    %v2161 = vadd.f32 %v2127, %v2151
    %v2162 = vadd.f32 %v2128, %v2151
    %v2163 = vadd.f32 %v2129, %v2151
    %v2164 = vadd.f32 %v2130, %v2151
    %v2165 = vadd.f32 %v2131, %v2151
    %v2166 = vadd.f32 %v2132, %v2151
    %v2167 = vadd.f32 %v2133, %v2151
    %v2168 = vadd.f32 %v2134, %v2151
    %v2169 = vadd.f32 %v2135, %v2151
    %v2170 = vadd.f32 %v2136, %v2151
    %v2171 = vadd.f32 %v2137, %v2151
    %v2172 = vadd.f32 %v2138, %v2151
    %v2173 = vadd.f32 %v2139, %v2151
    %v2174 = vadd.f32 %v2140, %v2151
    %v2175 = vadd.f32 %v2141, %v2151
    %v2176 = vadd.f32 %v2142, %v2151
    %v2177 = vadd.f32 %v2143, %v2151
    %v2178 = vadd.f32 %v2144, %v2151
    %v2179 = vadd.f32 %v2145, %v2151
    %v2180 = vadd.f32 %v2146, %v2151
    %v2181 = vadd.f32 %v2147, %v2151
    %v2182 = vadd.f32 %v2148, %v2151
    %v2183 = vadd.f32 %v2149, %v2151
    %v2184 = vmax.f32 %v2152, 0.0
    %v2185 = vmax.f32 %v2153, 0.0
    %v2186 = vmax.f32 %v2154, 0.0
    %v2187 = vmax.f32 %v2155, 0.0
    %v2188 = vmax.f32 %v2156, 0.0
    %v2189 = vmax.f32 %v2157, 0.0
    %v2190 = vmax.f32 %v2158, 0.0
    %v2191 = vmax.f32 %v2159, 0.0
    %v2192 = vmax.f32 %v2160, 0.0
    %v2193 = vmax.f32 %v2161, 0.0
    %v2194 = vmax.f32 %v2162, 0.0
    %v2195 = vmax.f32 %v2163, 0.0
    %v2196 = vmax.f32 %v2164, 0.0
    %v2197 = vmax.f32 %v2165, 0.0
    %v2198 = vmax.f32 %v2166, 0.0
    %v2199 = vmax.f32 %v2167, 0.0
    %v2200 = vmax.f32 %v2168, 0.0
    %v2201 = vmax.f32 %v2169, 0.0
    %v2202 = vmax.f32 %v2170, 0.0
    %v2203 = vmax.f32 %v2171, 0.0
    %v2204 = vmax.f32 %v2172, 0.0
    %v2205 = vmax.f32 %v2173, 0.0
    %v2206 = vmax.f32 %v2174, 0.0
    %v2207 = vmax.f32 %v2175, 0.0
    %v2208 = vmax.f32 %v2176, 0.0
    %v2209 = vmax.f32 %v2177, 0.0
    %v2210 = vmax.f32 %v2178, 0.0
    %v2211 = vmax.f32 %v2179, 0.0
    %v2212 = vmax.f32 %v2180, 0.0
    %v2213 = vmax.f32 %v2181, 0.0
    %v2214 = vmax.f32 %v2182, 0.0
    %v2215 = vmax.f32 %v2183, 0.0
    %2217 = vset.pattern.permute.xlu0 0
    %2218 = vperm.xlu0 %2217, %v2184
    %v2219 = vpop.permute.xlu0 %2218
    %2222 = vset.pattern.permute.xlu0 0
    %2223 = vperm.xlu0 %2222, %v2185
    %v2224 = vpop.permute.xlu0 %2223
    %2227 = vset.pattern.permute.xlu0 0
    %2228 = vperm.xlu0 %2227, %v2186
    %v2229 = vpop.permute.xlu0 %2228
    %2232 = vset.pattern.permute.xlu0 0
    %2233 = vperm.xlu0 %2232, %v2187
    %v2234 = vpop.permute.xlu0 %2233
    %2237 = vset.pattern.permute.xlu0 0
    %2238 = vperm.xlu0 %2237, %v2188
    %v2239 = vpop.permute.xlu0 %2238
    %2242 = vset.pattern.permute.xlu0 0
    %2243 = vperm.xlu0 %2242, %v2189
    %v2244 = vpop.permute.xlu0 %2243
    %2247 = vset.pattern.permute.xlu0 0
    %2248 = vperm.xlu0 %2247, %v2190
    %v2249 = vpop.permute.xlu0 %2248
    %2252 = vset.pattern.permute.xlu0 0
    %2253 = vperm.xlu0 %2252, %v2191
    %v2254 = vpop.permute.xlu0 %2253
    %2257 = vset.pattern.permute.xlu0 0
    %2258 = vperm.xlu0 %2257, %v2192
    %v2259 = vpop.permute.xlu0 %2258
    %2262 = vset.pattern.permute.xlu0 0
    %2263 = vperm.xlu0 %2262, %v2193
    %v2264 = vpop.permute.xlu0 %2263
    %2267 = vset.pattern.permute.xlu0 0
    %2268 = vperm.xlu0 %2267, %v2194
    %v2269 = vpop.permute.xlu0 %2268
    %2272 = vset.pattern.permute.xlu0 0
    %2273 = vperm.xlu0 %2272, %v2195
    %v2274 = vpop.permute.xlu0 %2273
    %2277 = vset.pattern.permute.xlu0 0
    %2278 = vperm.xlu0 %2277, %v2196
    %v2279 = vpop.permute.xlu0 %2278
    %2282 = vset.pattern.permute.xlu0 0
    %2283 = vperm.xlu0 %2282, %v2197
    %v2284 = vpop.permute.xlu0 %2283
    %2287 = vset.pattern.permute.xlu0 0
    %2288 = vperm.xlu0 %2287, %v2198
    %v2289 = vpop.permute.xlu0 %2288
    %2292 = vset.pattern.permute.xlu0 0
    %2293 = vperm.xlu0 %2292, %v2199
    %v2294 = vpop.permute.xlu0 %2293
    %2297 = vset.pattern.permute.xlu0 0
    %2298 = vperm.xlu0 %2297, %v2200
    %v2299 = vpop.permute.xlu0 %2298
    %2302 = vset.pattern.permute.xlu0 0
    %2303 = vperm.xlu0 %2302, %v2201
    %v2304 = vpop.permute.xlu0 %2303
    %2307 = vset.pattern.permute.xlu0 0
    %2308 = vperm.xlu0 %2307, %v2202
    %v2309 = vpop.permute.xlu0 %2308
    %2312 = vset.pattern.permute.xlu0 0
    %2313 = vperm.xlu0 %2312, %v2203
    %v2314 = vpop.permute.xlu0 %2313
    %2317 = vset.pattern.permute.xlu0 0
    %2318 = vperm.xlu0 %2317, %v2204
    %v2319 = vpop.permute.xlu0 %2318
    %2322 = vset.pattern.permute.xlu0 0
    %2323 = vperm.xlu0 %2322, %v2205
    %v2324 = vpop.permute.xlu0 %2323
    %2327 = vset.pattern.permute.xlu0 0
    %2328 = vperm.xlu0 %2327, %v2206
    %v2329 = vpop.permute.xlu0 %2328
    %2332 = vset.pattern.permute.xlu0 0
    %2333 = vperm.xlu0 %2332, %v2207
    %v2334 = vpop.permute.xlu0 %2333
    %2337 = vset.pattern.permute.xlu0 0
    %2338 = vperm.xlu0 %2337, %v2208
    %v2339 = vpop.permute.xlu0 %2338
    %2342 = vset.pattern.permute.xlu0 0
    %2343 = vperm.xlu0 %2342, %v2209
    %v2344 = vpop.permute.xlu0 %2343
    %2347 = vset.pattern.permute.xlu0 0
    %2348 = vperm.xlu0 %2347, %v2210
    %v2349 = vpop.permute.xlu0 %2348
    %2352 = vset.pattern.permute.xlu0 0
    %2353 = vperm.xlu0 %2352, %v2211
    %v2354 = vpop.permute.xlu0 %2353
    %2357 = vset.pattern.permute.xlu0 0
    %2358 = vperm.xlu0 %2357, %v2212
    %v2359 = vpop.permute.xlu0 %2358
    %2362 = vset.pattern.permute.xlu0 0
    %2363 = vperm.xlu0 %2362, %v2213
    %v2364 = vpop.permute.xlu0 %2363
    %2367 = vset.pattern.permute.xlu0 0
    %2368 = vperm.xlu0 %2367, %v2214
    %v2369 = vpop.permute.xlu0 %2368
    %2372 = vset.pattern.permute.xlu0 0
    %2373 = vperm.xlu0 %2372, %v2215
    %v2374 = vpop.permute.xlu0 %2373
    %v2376 = vmul.f32 %v2219, %v63
    %v2377 = vmul.f32 %v2224, %v64
    %v2378 = vmul.f32 %v2229, %v65
    %v2379 = vmul.f32 %v2234, %v66
    %v2380 = vmul.f32 %v2239, %v67
    %v2381 = vmul.f32 %v2244, %v68
    %v2382 = vmul.f32 %v2249, %v69
    %v2383 = vmul.f32 %v2254, %v70
    %v2384 = vmul.f32 %v2259, %v71
    %v2385 = vmul.f32 %v2264, %v72
    %v2386 = vmul.f32 %v2269, %v73
    %v2387 = vmul.f32 %v2274, %v74
    %v2388 = vmul.f32 %v2279, %v75
    %v2389 = vmul.f32 %v2284, %v76
    %v2390 = vmul.f32 %v2289, %v77
    %v2391 = vmul.f32 %v2294, %v78
    %v2392 = vmul.f32 %v2299, %v63
    %v2393 = vmul.f32 %v2304, %v64
    %v2394 = vmul.f32 %v2309, %v65
    %v2395 = vmul.f32 %v2314, %v66
    %v2396 = vmul.f32 %v2319, %v67
    %v2397 = vmul.f32 %v2324, %v68
    %v2398 = vmul.f32 %v2329, %v69
    %v2399 = vmul.f32 %v2334, %v70
    %v2400 = vmul.f32 %v2339, %v71
    %v2401 = vmul.f32 %v2344, %v72
    %v2402 = vmul.f32 %v2349, %v73
    %v2403 = vmul.f32 %v2354, %v74
    %v2404 = vmul.f32 %v2359, %v75
    %v2405 = vmul.f32 %v2364, %v76
    %v2406 = vmul.f32 %v2369, %v77
    %v2407 = vmul.f32 %v2374, %v78
    %vm2408 = vcmask 15360
    %v2409 = vsel %vm2408, %v2376, 0.0
    %v2410 = vsel %vm2408, %v2377, 0.0
    %v2411 = vadd.f32 %v2409, %v2410
    %v2412 = vsel %vm2408, %v2378, 0.0
    %v2413 = vadd.f32 %v2411, %v2412
    %v2414 = vsel %vm2408, %v2379, 0.0
    %v2415 = vadd.f32 %v2413, %v2414
    %v2416 = vsel %vm2408, %v2380, 0.0
    %v2417 = vadd.f32 %v2415, %v2416
    %v2418 = vsel %vm2408, %v2381, 0.0
    %v2419 = vadd.f32 %v2417, %v2418
    %v2420 = vsel %vm2408, %v2382, 0.0
    %v2421 = vadd.f32 %v2419, %v2420
    %v2422 = vsel %vm2408, %v2383, 0.0
    %v2423 = vadd.f32 %v2421, %v2422
    %v2424 = vsel %vm2408, %v2384, 0.0
    %v2425 = vadd.f32 %v2423, %v2424
    %v2426 = vsel %vm2408, %v2385, 0.0
    %v2427 = vadd.f32 %v2425, %v2426
    %v2428 = vsel %vm2408, %v2386, 0.0
    %v2429 = vadd.f32 %v2427, %v2428
    %v2430 = vsel %vm2408, %v2387, 0.0
    %v2431 = vadd.f32 %v2429, %v2430
    %v2432 = vsel %vm2408, %v2388, 0.0
    %v2433 = vadd.f32 %v2431, %v2432
    %v2434 = vsel %vm2408, %v2389, 0.0
    %v2435 = vadd.f32 %v2433, %v2434
    %v2436 = vsel %vm2408, %v2390, 0.0
    %v2437 = vadd.f32 %v2435, %v2436
    %vm2438 = vcmask 13312
    %v2439 = vsel %vm2438, %v2391, 0.0
    %v2440 = vadd.f32 %v2437, %v2439
    %v2441 = vrot.slane %v2440, 4
    %v2442 = vadd.f32 %v2440, %v2441
    %v2443 = vrot.slane %v2442, 2
    %v2444 = vadd.f32 %v2442, %v2443
    %v2445 = vrot.slane %v2444, 1
    %v2446 = vadd.f32 %v2444, %v2445
    %v2447 = vsel %vm2408, %v2392, 0.0
    %v2448 = vsel %vm2408, %v2393, 0.0
    %v2449 = vadd.f32 %v2447, %v2448
    %v2450 = vsel %vm2408, %v2394, 0.0
    %v2451 = vadd.f32 %v2449, %v2450
    %v2452 = vsel %vm2408, %v2395, 0.0
    %v2453 = vadd.f32 %v2451, %v2452
    %v2454 = vsel %vm2408, %v2396, 0.0
    %v2455 = vadd.f32 %v2453, %v2454
    %v2456 = vsel %vm2408, %v2397, 0.0
    %v2457 = vadd.f32 %v2455, %v2456
    %v2458 = vsel %vm2408, %v2398, 0.0
    %v2459 = vadd.f32 %v2457, %v2458
    %v2460 = vsel %vm2408, %v2399, 0.0
    %v2461 = vadd.f32 %v2459, %v2460
    %v2462 = vsel %vm2408, %v2400, 0.0
    %v2463 = vadd.f32 %v2461, %v2462
    %v2464 = vsel %vm2408, %v2401, 0.0
    %v2465 = vadd.f32 %v2463, %v2464
    %v2466 = vsel %vm2408, %v2402, 0.0
    %v2467 = vadd.f32 %v2465, %v2466
    %v2468 = vsel %vm2408, %v2403, 0.0
    %v2469 = vadd.f32 %v2467, %v2468
    %v2470 = vsel %vm2408, %v2404, 0.0
    %v2471 = vadd.f32 %v2469, %v2470
    %v2472 = vsel %vm2408, %v2405, 0.0
    %v2473 = vadd.f32 %v2471, %v2472
    %v2474 = vsel %vm2408, %v2406, 0.0
    %v2475 = vadd.f32 %v2473, %v2474
    %v2476 = vsel %vm2438, %v2407, 0.0
    %v2477 = vadd.f32 %v2475, %v2476
    %v2478 = vrot.slane %v2477, 4
    %v2479 = vadd.f32 %v2477, %v2478
    %v2480 = vrot.slane %v2479, 2
    %v2481 = vadd.f32 %v2479, %v2480
    %v2482 = vrot.slane %v2481, 1
    %v2483 = vadd.f32 %v2481, %v2482
    %2484 = vrot.lane.b32.xlu0 %v627, 124
    %v2485 = vpop.permute.xlu0 %2484
    %v2487 = vadd.f32 %v2446, %v2485
    %v2488 = vadd.f32 %v2483, %v2485
    %v2491 = vrot.slane %v2488, 7
    %vm2492 = vcmask 1041409
    %v2493 = vsel %vm2492, %v2491, %v2487
    %vm2495 = vcmask 9216
    %2496 = vst.msk [vmem:[#allocation5] sm:$0x3] %vm2495, %v2493
    // Predicated region
    $region18: #{_pump_discriminator.1} parent=1 // pred_check
      _
    $region19: #{_pump_discriminator.1} parent=1 // pred_check_branch
      %2498 = sbr.rel (0) target = $region21
    $region20: #{_pump_discriminator.1} parent=1 // pred_region
      %s2500 = ssub.s32 32, 32
      %2501 = vsyncadd [#allocation3], %s2500
      %s2503 = sshll.u32 [#allocation5], 4
      %s2504 = int_to_ptr.vmem [resolvable:$true] %s2503
      %2506 = dma.vmem_to_hbm [thread:$0]  %s2504, 32, %s3, [#allocation3]
    $region21: #{_pump_discriminator.1} parent=1 // pred_fallthru
      _
    // Predicated region
    $region22: #{_pump_discriminator.1} parent=1 // pred_check
      _
    $region23: #{_pump_discriminator.1} parent=1 // pred_check_branch
      %2508 = sbr.rel (0) target = $region25
    $region24: #{_pump_discriminator.1} parent=1 // pred_region
      %2509 = dma.done [#allocation3], 32
    $region25: #{_pump_discriminator.1} parent=1 // pred_fallthru
      _
    %2510 = vsyncpa [#allocation3], 1
    %2511 = vsyncpa [#allocation4], 1

</llo_original>
